<compile_context>
chip_gen: v5e
topology: v5e:2x2
jax: 0.10.0
libtpu: 0.0.40
codegen_flags: <defaults>
</compile_context>

<pallas_src>
import jax
import jax.numpy as jnp
from jax import lax
from jax.experimental import pallas as pl
from jax.experimental.pallas import tpu as pltpu

# ---- module hyperparameters (from the PyTorch source) -------------------------------
N_EMBED = 192          # n_embed
BLOCK_SIZE = 256       # block_size (only the first T rows of pos-emb are ever used)
NUM_HEADS = 4
HEAD_SIZE = N_EMBED // NUM_HEADS   # 48
MASK_NEG = -1e30       # large-finite mask value (diagonal is never masked)
# TODO(synk): nn.Dropout(p=0.2) on attention weights and on the projection output is
#             implemented as identity (eval / inference mode only).


# ---------------------------------------------------------------------------------------
# Fused kernel: QKV matmul + all heads + per-head projection accumulation for a block of
# `Bb` batch elements.  grid = (B // Bb,)
# ---------------------------------------------------------------------------------------
def _mha_kernel(x_ref, wqkv_ref, bias_ref, wproj_ref, bproj_ref, o_ref, acc_ref):
    Bb, T, C = x_ref.shape
    nh, H = NUM_HEADS, HEAD_SIZE

    # One fat bf16 MXU matmul for every batch element's and every head's K, Q, V at once:
    # (Bb*T, C) @ (C, 3C), f32 accumulation.  Scale is already folded into the Q columns.
    x2d = x_ref[...].reshape(Bb * T, C)                                  # bf16
    qkv = jnp.dot(x2d, wqkv_ref[...],
                  preferred_element_type=jnp.float32)                    # (Bb*T, 3C) f32
    qkv = qkv.astype(jnp.bfloat16).reshape(Bb, T, 3 * C)                 # bf16 for reuse as MXU operands

    bproj = bproj_ref[...]                                               # (1, C) f32

    for b in range(Bb):                                                  # static unroll
        k_all = qkv[b, :, 0 * C:1 * C]                                   # (T, nh*H) bf16
        q_all = qkv[b, :, 1 * C:2 * C]                                   # scale pre-folded
        v_all = qkv[b, :, 2 * C:3 * C]

        acc_ref[...] = jnp.zeros_like(acc_ref)                           # (T, C) f32 scratch

        for h in range(nh):                                              # static unroll
            sl = slice(h * H, (h + 1) * H)
            q, k, v = q_all[:, sl], k_all[:, sl], v_all[:, sl]           # (T, H) bf16

            # q @ k^T via last-axis contraction (no in-kernel transpose), f32 accum.
            wei = lax.dot_general(q, k, (((1,), (1,)), ((), ())),
                                  preferred_element_type=jnp.float32)    # (T, T)
            # per-head bias read (pos bias + causal mask), upcast bf16 -> f32
            wei = wei + bias_ref[h].astype(jnp.float32)

            # numerically-stable f32 softmax; divide goes to the EUP (approx reciprocal)
            m = jnp.max(wei, axis=-1, keepdims=True)
            e = jnp.exp(wei - m)
            inv = pl.reciprocal(jnp.sum(e, axis=-1, keepdims=True), approx=True)
            p = (e * inv).astype(jnp.bfloat16)

            head = jnp.dot(p, v, preferred_element_type=jnp.float32)     # (T, H) f32
            # per-head projection accumulation replaces head-concat + one big proj matmul
            acc_ref[...] += jnp.dot(head.astype(jnp.bfloat16), wproj_ref[h],
                                    preferred_element_type=jnp.float32)  # (T, C)

        o_ref[b] = acc_ref[...] + bproj                                  # lane-dense (T, C) store


def _mha_pallas(x_bf, w_qkv, bias, w_proj_hr, b_proj, *, block_b):
    B, T, C = x_bf.shape
    nh, H = NUM_HEADS, HEAD_SIZE
    return pl.pallas_call(
        _mha_kernel,
        out_shape=jax.ShapeDtypeStruct((B, T, C), jnp.float32),
        grid_spec=pltpu.PrefetchScalarGridSpec(
            num_scalar_prefetch=0,
            grid=(B // block_b,),
            in_specs=[
                pl.BlockSpec((block_b, T, C), lambda i: (i, 0, 0)),      # x block (bf16)
                pl.BlockSpec((C, 3 * C), lambda i: (0, 0)),              # stacked QKV weight (resident, bf16)
                pl.BlockSpec((nh, T, T), lambda i: (0, 0, 0)),           # pos bias + mask (resident, bf16)
                pl.BlockSpec((nh, H, C), lambda i: (0, 0, 0)),           # per-head proj weight (resident, bf16)
                pl.BlockSpec((1, C), lambda i: (0, 0)),                  # proj bias (resident, f32)
            ],
            out_specs=pl.BlockSpec((block_b, T, C), lambda i: (i, 0, 0)),
            scratch_shapes=[pltpu.VMEM((T, C), jnp.float32)],            # projection accumulator
        ),
        compiler_params=pltpu.CompilerParams(
            dimension_semantics=("parallel",)),                          # batch blocks across cores (v7x)
    )(x_bf, w_qkv, bias, w_proj_hr, b_proj)


def _pick_block_b(B):
    # Fill the MXU M dimension for large B while keeping >= 2 grid steps (dual-TC on v7x).
    for bb in (8, 4, 2):
        if B % bb == 0 and B // bb >= 2:
            return bb
    return 1


# ---------------------------------------------------------------------------------------
# Full module forward: cheap XLA-side precompute + one fused pallas_call.
# ---------------------------------------------------------------------------------------
def multi_headed_attention(x, params):
    B, T, C = x.shape
    nh, H = NUM_HEADS, HEAD_SIZE
    scale = jnp.float32(N_EMBED) ** jnp.float32(-0.5)

    # Stacked, pre-transposed QKV weight: (C, 3*nh*H) = [K | Q | V], softmax scale folded
    # into the Q columns (applies to q.k^T only, never to the pos bias — matches torch).
    wk_t = jnp.transpose(params["wk"], (2, 0, 1)).reshape(C, nh * H)     # (C, nh*H)
    wq_t = jnp.transpose(params["wq"], (2, 0, 1)).reshape(C, nh * H) * scale
    wv_t = jnp.transpose(params["wv"], (2, 0, 1)).reshape(C, nh * H)
    w_qkv = jnp.concatenate([wk_t, wq_t, wv_t], axis=1).astype(jnp.bfloat16)

    # Relative-position bias with the causal mask folded in (batch-independent), f32
    # precompute then stored bf16 (halves the largest DMA'd operand / its VMEM residency).
    pos = params["pos_emb"][:, :T, :]                                    # (nh, T, C)
    pos_k = jnp.einsum('htc,hdc->htd', pos, params["wk"])                # (nh, T, H)
    pos_q = jnp.einsum('htc,hdc->htd', pos, params["wq"])                # unscaled (matches torch)
    pos_bias = jnp.einsum('hid,hjd->hij', pos_k, pos_q)                  # (nh, T, T)
    causal = jnp.tril(jnp.ones((T, T), jnp.float32))
    bias = (pos_bias +
            jnp.where(causal == 0, jnp.float32(MASK_NEG), jnp.float32(0.0))
            ).astype(jnp.bfloat16)

    # Projection weight in (in, out) layout, split per head: (nh, H, C).
    w_proj_hr = params["proj_w"].T.reshape(nh, H, C).astype(jnp.bfloat16)
    b_proj = params["proj_b"].astype(jnp.float32)                        # (1, C)

    return _mha_pallas(x.astype(jnp.bfloat16), w_qkv, bias, w_proj_hr, b_proj,
                       block_b=_pick_block_b(B))


# Pure-JAX f32 reference for the correctness check (mirrors the PyTorch module).
def reference(x, params):
    B, T, C = x.shape
    outs = []
    scale = N_EMBED ** -0.5
    tril = jnp.tril(jnp.ones((T, T)))
    for h in range(NUM_HEADS):
        wk, wq, wv = params["wk"][h], params["wq"][h], params["wv"][h]
        pos = params["pos_emb"][h, :T, :]
        k, q, v = x @ wk.T, x @ wq.T, x @ wv.T
        pos_bias = (pos @ wk.T) @ (pos @ wq.T).T
        wei = q @ jnp.swapaxes(k, -2, -1) * scale + pos_bias
        wei = jnp.where(tril == 0, -jnp.inf, wei)
        wei = jax.nn.softmax(wei, axis=-1)
        outs.append(wei @ v)
    cat = jnp.concatenate(outs, axis=-1)
    return cat @ params["proj_w"].T + params["proj_b"][0]


if __name__ == "__main__":
    key = jax.random.PRNGKey(0)
    B, T = 2, 8

    ks = jax.random.split(key, 8)
    bound = 1.0 / (N_EMBED ** 0.5)
    params = {
        "wk": jax.random.uniform(ks[0], (NUM_HEADS, HEAD_SIZE, N_EMBED),
                                 jnp.float32, -bound, bound),
        "wq": jax.random.uniform(ks[1], (NUM_HEADS, HEAD_SIZE, N_EMBED),
                                 jnp.float32, -bound, bound),
        "wv": jax.random.uniform(ks[2], (NUM_HEADS, HEAD_SIZE, N_EMBED),
                                 jnp.float32, -bound, bound),
        "pos_emb": jax.random.normal(ks[3], (NUM_HEADS, BLOCK_SIZE, N_EMBED),
                                     jnp.float32) * 0.02,
        "proj_w": jax.random.uniform(ks[4], (N_EMBED, N_EMBED),
                                     jnp.float32, -bound, bound),
        "proj_b": jax.random.uniform(ks[5], (1, N_EMBED),
                                     jnp.float32, -bound, bound),
    }
    x = jax.random.normal(ks[6], (B, T, N_EMBED), jnp.float32)

    out = jax.block_until_ready(multi_headed_attention(x, params))
    ref = reference(x, params)
    assert out.shape == (B, T, N_EMBED)
    # tolerance covers bf16 MXU operands (f32 accumulation) + EUP approx reciprocal
    err = float(jnp.max(jnp.abs(out - ref)))
    assert jnp.allclose(out, ref, atol=2e-2, rtol=2e-2), err
    print("KERNEL_OK")
</pallas_src>

<mosaic_0001>
module attributes {stable_mosaic.version = 11 : i64} {
  func.func @_mha_kernel(%arg0: i32, %arg1: memref<1x8x192xbf16, #tpu.memory_space<vmem>>, %arg2: memref<192x576xbf16, #tpu.memory_space<vmem>>, %arg3: memref<4x8x8xbf16, #tpu.memory_space<vmem>>, %arg4: memref<4x48x192xbf16, #tpu.memory_space<vmem>>, %arg5: memref<1x192xf32, #tpu.memory_space<vmem>>, %arg6: memref<1x8x192xf32, #tpu.memory_space<vmem>>, %arg7: memref<8x192xf32, #tpu.memory_space<vmem>>) attributes {dimension_semantics = [#tpu.dimension_semantics<parallel>], iteration_bounds = array<i64: 2>, scalar_prefetch = 0 : i64, scratch_operands = 1 : i64, tpu.core_type = #tpu.core_type<tc>, window_params = [{transform_indices = @transform_0, window_bounds = array<i64: 1, 8, 192>}, {pipeline_mode = #tpu.pipeline_mode<synchronous>, transform_indices = @transform_1, window_bounds = array<i64: 192, 576>}, {pipeline_mode = #tpu.pipeline_mode<synchronous>, transform_indices = @transform_2, window_bounds = array<i64: 4, 8, 8>}, {pipeline_mode = #tpu.pipeline_mode<synchronous>, transform_indices = @transform_3, window_bounds = array<i64: 4, 48, 192>}, {pipeline_mode = #tpu.pipeline_mode<synchronous>, transform_indices = @transform_4, window_bounds = array<i64: 1, 192>}, {transform_indices = @transform_5, window_bounds = array<i64: 1, 8, 192>}]} {
    %c0 = arith.constant 0 : index
    %c0_0 = arith.constant 0 : index
    %c0_1 = arith.constant 0 : index
    %0 = vector.load %arg1[%c0, %c0_0, %c0_1] : memref<1x8x192xbf16, #tpu.memory_space<vmem>>, vector<1x8x192xbf16>
    %1 = vector.shape_cast %0 : vector<1x8x192xbf16> to vector<8x192xbf16>
    %c0_2 = arith.constant 0 : index
    %c0_3 = arith.constant 0 : index
    %2 = vector.load %arg2[%c0_2, %c0_3] : memref<192x576xbf16, #tpu.memory_space<vmem>>, vector<192x576xbf16>
    %cst = arith.constant dense<0.000000e+00> : vector<8x576xf32>
    %3 = tpu.matmul %1, %2, %cst {dimension_numbers = #tpu.dot_dimension_numbers<[1], [0], [0], [1], [0, 0, 1, 1], [], []>} : vector<8x192xbf16>, vector<192x576xbf16>, vector<8x576xf32> -> vector<8x576xf32>
    %4 = arith.truncf %3 : vector<8x576xf32> to vector<8x576xbf16>
    %5 = vector.shape_cast %4 : vector<8x576xbf16> to vector<1x8x576xbf16>
    %c0_4 = arith.constant 0 : index
    %c0_5 = arith.constant 0 : index
    %6 = vector.load %arg5[%c0_4, %c0_5] : memref<1x192xf32, #tpu.memory_space<vmem>>, vector<1x192xf32>
    %7 = vector.extract_strided_slice %5 {offsets = [0, 0, 0], sizes = [1, 8, 192], strides = [1, 1, 1]} : vector<1x8x576xbf16> to vector<1x8x192xbf16>
    %8 = vector.shape_cast %7 : vector<1x8x192xbf16> to vector<8x192xbf16>
    %9 = vector.extract_strided_slice %5 {offsets = [0, 0, 192], sizes = [1, 8, 192], strides = [1, 1, 1]} : vector<1x8x576xbf16> to vector<1x8x192xbf16>
    %10 = vector.shape_cast %9 : vector<1x8x192xbf16> to vector<8x192xbf16>
    %11 = vector.extract_strided_slice %5 {offsets = [0, 0, 384], sizes = [1, 8, 192], strides = [1, 1, 1]} : vector<1x8x576xbf16> to vector<1x8x192xbf16>
    %12 = vector.shape_cast %11 : vector<1x8x192xbf16> to vector<8x192xbf16>
    %cst_6 = arith.constant 0.000000e+00 : f32
    %13 = vector.broadcast %cst_6 : f32 to vector<8x192xf32>
    %c0_7 = arith.constant 0 : index
    %c0_8 = arith.constant 0 : index
    %14 = vector.load %arg7[%c0_7, %c0_8] : memref<8x192xf32, #tpu.memory_space<vmem>>, vector<8x192xf32>
    tpu.vector_store %arg7[%c0_7, %c0_8], %13 {strides = array<i32>} : memref<8x192xf32, #tpu.memory_space<vmem>>, vector<8x192xf32>,
    %15 = vector.extract_strided_slice %10 {offsets = [0, 0], sizes = [8, 48], strides = [1, 1]} : vector<8x192xbf16> to vector<8x48xbf16>
    %16 = vector.extract_strided_slice %8 {offsets = [0, 0], sizes = [8, 48], strides = [1, 1]} : vector<8x192xbf16> to vector<8x48xbf16>
    %17 = vector.extract_strided_slice %12 {offsets = [0, 0], sizes = [8, 48], strides = [1, 1]} : vector<8x192xbf16> to vector<8x48xbf16>
    %cst_9 = arith.constant dense<0.000000e+00> : vector<8x8xf32>
    %18 = tpu.matmul %15, %16, %cst_9 {dimension_numbers = #tpu.dot_dimension_numbers<[1], [1], [0], [0], [0, 0, 1, 0], [], []>} : vector<8x48xbf16>, vector<8x48xbf16>, vector<8x8xf32> -> vector<8x8xf32>
    %c0_10 = arith.constant 0 : index
    %c0_11 = arith.constant 0 : index
    %c0_12 = arith.constant 0 : index
    %19 = vector.load %arg3[%c0_10, %c0_11, %c0_12] : memref<4x8x8xbf16, #tpu.memory_space<vmem>>, vector<1x8x8xbf16>
    %20 = vector.shape_cast %19 : vector<1x8x8xbf16> to vector<8x8xbf16>
    %21 = arith.extf %20 : vector<8x8xbf16> to vector<8x8xf32>
    %22 = arith.addf %18, %21 : vector<8x8xf32>
    %cst_13 = arith.constant dense<0xFF800000> : vector<8xf32>
    %23 = vector.multi_reduction <maximumf>, %22, %cst_13 [1] : vector<8x8xf32> to vector<8xf32>
    %24 = vector.shape_cast %23 : vector<8xf32> to vector<8x1xf32>
    %25 = vector.broadcast %24 : vector<8x1xf32> to vector<8x8xf32>
    %26 = arith.subf %22, %25 : vector<8x8xf32>
    %27 = math.exp %26 : vector<8x8xf32>
    %cst_14 = arith.constant dense<0.000000e+00> : vector<8xf32>
    %28 = vector.multi_reduction <add>, %27, %cst_14 [1] : vector<8x8xf32> to vector<8xf32>
    %29 = vector.shape_cast %28 : vector<8xf32> to vector<8x1xf32>
    %30 = tpu.reciprocal %29 {approx = true} : vector<8x1xf32> -> vector<8x1xf32>
    %31 = vector.broadcast %30 : vector<8x1xf32> to vector<8x8xf32>
    %32 = arith.mulf %27, %31 : vector<8x8xf32>
    %33 = arith.truncf %32 : vector<8x8xf32> to vector<8x8xbf16>
    %cst_15 = arith.constant dense<0.000000e+00> : vector<8x48xf32>
    %34 = tpu.matmul %33, %17, %cst_15 {dimension_numbers = #tpu.dot_dimension_numbers<[1], [0], [0], [1], [0, 0, 1, 1], [], []>} : vector<8x8xbf16>, vector<8x48xbf16>, vector<8x48xf32> -> vector<8x48xf32>
    %c0_16 = arith.constant 0 : index
    %c0_17 = arith.constant 0 : index
    %35 = vector.load %arg7[%c0_16, %c0_17] : memref<8x192xf32, #tpu.memory_space<vmem>>, vector<8x192xf32>
    %36 = arith.truncf %34 : vector<8x48xf32> to vector<8x48xbf16>
    %c0_18 = arith.constant 0 : index
    %c0_19 = arith.constant 0 : index
    %c0_20 = arith.constant 0 : index
    %37 = vector.load %arg4[%c0_18, %c0_19, %c0_20] : memref<4x48x192xbf16, #tpu.memory_space<vmem>>, vector<1x48x192xbf16>
    %38 = vector.shape_cast %37 : vector<1x48x192xbf16> to vector<48x192xbf16>
    %cst_21 = arith.constant dense<0.000000e+00> : vector<8x192xf32>
    %39 = tpu.matmul %36, %38, %cst_21 {dimension_numbers = #tpu.dot_dimension_numbers<[1], [0], [0], [1], [0, 0, 1, 1], [], []>} : vector<8x48xbf16>, vector<48x192xbf16>, vector<8x192xf32> -> vector<8x192xf32>
    %40 = arith.addf %35, %39 : vector<8x192xf32>
    %c0_22 = arith.constant 0 : index
    %c0_23 = arith.constant 0 : index
    %41 = vector.load %arg7[%c0_22, %c0_23] : memref<8x192xf32, #tpu.memory_space<vmem>>, vector<8x192xf32>
    tpu.vector_store %arg7[%c0_22, %c0_23], %40 {strides = array<i32>} : memref<8x192xf32, #tpu.memory_space<vmem>>, vector<8x192xf32>,
    %42 = vector.extract_strided_slice %10 {offsets = [0, 48], sizes = [8, 48], strides = [1, 1]} : vector<8x192xbf16> to vector<8x48xbf16>
    %43 = vector.extract_strided_slice %8 {offsets = [0, 48], sizes = [8, 48], strides = [1, 1]} : vector<8x192xbf16> to vector<8x48xbf16>
    %44 = vector.extract_strided_slice %12 {offsets = [0, 48], sizes = [8, 48], strides = [1, 1]} : vector<8x192xbf16> to vector<8x48xbf16>
    %cst_24 = arith.constant dense<0.000000e+00> : vector<8x8xf32>
    %45 = tpu.matmul %42, %43, %cst_24 {dimension_numbers = #tpu.dot_dimension_numbers<[1], [1], [0], [0], [0, 0, 1, 0], [], []>} : vector<8x48xbf16>, vector<8x48xbf16>, vector<8x8xf32> -> vector<8x8xf32>
    %c1 = arith.constant 1 : index
    %c0_25 = arith.constant 0 : index
    %c0_26 = arith.constant 0 : index
    %46 = vector.load %arg3[%c1, %c0_25, %c0_26] : memref<4x8x8xbf16, #tpu.memory_space<vmem>>, vector<1x8x8xbf16>
    %47 = vector.shape_cast %46 : vector<1x8x8xbf16> to vector<8x8xbf16>
    %48 = arith.extf %47 : vector<8x8xbf16> to vector<8x8xf32>
    %49 = arith.addf %45, %48 : vector<8x8xf32>
    %cst_27 = arith.constant dense<0xFF800000> : vector<8xf32>
    %50 = vector.multi_reduction <maximumf>, %49, %cst_27 [1] : vector<8x8xf32> to vector<8xf32>
    %51 = vector.shape_cast %50 : vector<8xf32> to vector<8x1xf32>
    %52 = vector.broadcast %51 : vector<8x1xf32> to vector<8x8xf32>
    %53 = arith.subf %49, %52 : vector<8x8xf32>
    %54 = math.exp %53 : vector<8x8xf32>
    %cst_28 = arith.constant dense<0.000000e+00> : vector<8xf32>
    %55 = vector.multi_reduction <add>, %54, %cst_28 [1] : vector<8x8xf32> to vector<8xf32>
    %56 = vector.shape_cast %55 : vector<8xf32> to vector<8x1xf32>
    %57 = tpu.reciprocal %56 {approx = true} : vector<8x1xf32> -> vector<8x1xf32>
    %58 = vector.broadcast %57 : vector<8x1xf32> to vector<8x8xf32>
    %59 = arith.mulf %54, %58 : vector<8x8xf32>
    %60 = arith.truncf %59 : vector<8x8xf32> to vector<8x8xbf16>
    %cst_29 = arith.constant dense<0.000000e+00> : vector<8x48xf32>
    %61 = tpu.matmul %60, %44, %cst_29 {dimension_numbers = #tpu.dot_dimension_numbers<[1], [0], [0], [1], [0, 0, 1, 1], [], []>} : vector<8x8xbf16>, vector<8x48xbf16>, vector<8x48xf32> -> vector<8x48xf32>
    %c0_30 = arith.constant 0 : index
    %c0_31 = arith.constant 0 : index
    %62 = vector.load %arg7[%c0_30, %c0_31] : memref<8x192xf32, #tpu.memory_space<vmem>>, vector<8x192xf32>
    %63 = arith.truncf %61 : vector<8x48xf32> to vector<8x48xbf16>
    %c1_32 = arith.constant 1 : index
    %c0_33 = arith.constant 0 : index
    %c0_34 = arith.constant 0 : index
    %64 = vector.load %arg4[%c1_32, %c0_33, %c0_34] : memref<4x48x192xbf16, #tpu.memory_space<vmem>>, vector<1x48x192xbf16>
    %65 = vector.shape_cast %64 : vector<1x48x192xbf16> to vector<48x192xbf16>
    %cst_35 = arith.constant dense<0.000000e+00> : vector<8x192xf32>
    %66 = tpu.matmul %63, %65, %cst_35 {dimension_numbers = #tpu.dot_dimension_numbers<[1], [0], [0], [1], [0, 0, 1, 1], [], []>} : vector<8x48xbf16>, vector<48x192xbf16>, vector<8x192xf32> -> vector<8x192xf32>
    %67 = arith.addf %62, %66 : vector<8x192xf32>
    %c0_36 = arith.constant 0 : index
    %c0_37 = arith.constant 0 : index
    %68 = vector.load %arg7[%c0_36, %c0_37] : memref<8x192xf32, #tpu.memory_space<vmem>>, vector<8x192xf32>
    tpu.vector_store %arg7[%c0_36, %c0_37], %67 {strides = array<i32>} : memref<8x192xf32, #tpu.memory_space<vmem>>, vector<8x192xf32>,
    %69 = vector.extract_strided_slice %10 {offsets = [0, 96], sizes = [8, 48], strides = [1, 1]} : vector<8x192xbf16> to vector<8x48xbf16>
    %70 = vector.extract_strided_slice %8 {offsets = [0, 96], sizes = [8, 48], strides = [1, 1]} : vector<8x192xbf16> to vector<8x48xbf16>
    %71 = vector.extract_strided_slice %12 {offsets = [0, 96], sizes = [8, 48], strides = [1, 1]} : vector<8x192xbf16> to vector<8x48xbf16>
    %cst_38 = arith.constant dense<0.000000e+00> : vector<8x8xf32>
    %72 = tpu.matmul %69, %70, %cst_38 {dimension_numbers = #tpu.dot_dimension_numbers<[1], [1], [0], [0], [0, 0, 1, 0], [], []>} : vector<8x48xbf16>, vector<8x48xbf16>, vector<8x8xf32> -> vector<8x8xf32>
    %c2 = arith.constant 2 : index
    %c0_39 = arith.constant 0 : index
    %c0_40 = arith.constant 0 : index
    %73 = vector.load %arg3[%c2, %c0_39, %c0_40] : memref<4x8x8xbf16, #tpu.memory_space<vmem>>, vector<1x8x8xbf16>
    %74 = vector.shape_cast %73 : vector<1x8x8xbf16> to vector<8x8xbf16>
    %75 = arith.extf %74 : vector<8x8xbf16> to vector<8x8xf32>
    %76 = arith.addf %72, %75 : vector<8x8xf32>
    %cst_41 = arith.constant dense<0xFF800000> : vector<8xf32>
    %77 = vector.multi_reduction <maximumf>, %76, %cst_41 [1] : vector<8x8xf32> to vector<8xf32>
    %78 = vector.shape_cast %77 : vector<8xf32> to vector<8x1xf32>
    %79 = vector.broadcast %78 : vector<8x1xf32> to vector<8x8xf32>
    %80 = arith.subf %76, %79 : vector<8x8xf32>
    %81 = math.exp %80 : vector<8x8xf32>
    %cst_42 = arith.constant dense<0.000000e+00> : vector<8xf32>
    %82 = vector.multi_reduction <add>, %81, %cst_42 [1] : vector<8x8xf32> to vector<8xf32>
    %83 = vector.shape_cast %82 : vector<8xf32> to vector<8x1xf32>
    %84 = tpu.reciprocal %83 {approx = true} : vector<8x1xf32> -> vector<8x1xf32>
    %85 = vector.broadcast %84 : vector<8x1xf32> to vector<8x8xf32>
    %86 = arith.mulf %81, %85 : vector<8x8xf32>
    %87 = arith.truncf %86 : vector<8x8xf32> to vector<8x8xbf16>
    %cst_43 = arith.constant dense<0.000000e+00> : vector<8x48xf32>
    %88 = tpu.matmul %87, %71, %cst_43 {dimension_numbers = #tpu.dot_dimension_numbers<[1], [0], [0], [1], [0, 0, 1, 1], [], []>} : vector<8x8xbf16>, vector<8x48xbf16>, vector<8x48xf32> -> vector<8x48xf32>
    %c0_44 = arith.constant 0 : index
    %c0_45 = arith.constant 0 : index
    %89 = vector.load %arg7[%c0_44, %c0_45] : memref<8x192xf32, #tpu.memory_space<vmem>>, vector<8x192xf32>
    %90 = arith.truncf %88 : vector<8x48xf32> to vector<8x48xbf16>
    %c2_46 = arith.constant 2 : index
    %c0_47 = arith.constant 0 : index
    %c0_48 = arith.constant 0 : index
    %91 = vector.load %arg4[%c2_46, %c0_47, %c0_48] : memref<4x48x192xbf16, #tpu.memory_space<vmem>>, vector<1x48x192xbf16>
    %92 = vector.shape_cast %91 : vector<1x48x192xbf16> to vector<48x192xbf16>
    %cst_49 = arith.constant dense<0.000000e+00> : vector<8x192xf32>
    %93 = tpu.matmul %90, %92, %cst_49 {dimension_numbers = #tpu.dot_dimension_numbers<[1], [0], [0], [1], [0, 0, 1, 1], [], []>} : vector<8x48xbf16>, vector<48x192xbf16>, vector<8x192xf32> -> vector<8x192xf32>
    %94 = arith.addf %89, %93 : vector<8x192xf32>
    %c0_50 = arith.constant 0 : index
    %c0_51 = arith.constant 0 : index
    %95 = vector.load %arg7[%c0_50, %c0_51] : memref<8x192xf32, #tpu.memory_space<vmem>>, vector<8x192xf32>
    tpu.vector_store %arg7[%c0_50, %c0_51], %94 {strides = array<i32>} : memref<8x192xf32, #tpu.memory_space<vmem>>, vector<8x192xf32>,
    %96 = vector.extract_strided_slice %10 {offsets = [0, 144], sizes = [8, 48], strides = [1, 1]} : vector<8x192xbf16> to vector<8x48xbf16>
    %97 = vector.extract_strided_slice %8 {offsets = [0, 144], sizes = [8, 48], strides = [1, 1]} : vector<8x192xbf16> to vector<8x48xbf16>
    %98 = vector.extract_strided_slice %12 {offsets = [0, 144], sizes = [8, 48], strides = [1, 1]} : vector<8x192xbf16> to vector<8x48xbf16>
    %cst_52 = arith.constant dense<0.000000e+00> : vector<8x8xf32>
    %99 = tpu.matmul %96, %97, %cst_52 {dimension_numbers = #tpu.dot_dimension_numbers<[1], [1], [0], [0], [0, 0, 1, 0], [], []>} : vector<8x48xbf16>, vector<8x48xbf16>, vector<8x8xf32> -> vector<8x8xf32>
    %c3 = arith.constant 3 : index
    %c0_53 = arith.constant 0 : index
    %c0_54 = arith.constant 0 : index
    %100 = vector.load %arg3[%c3, %c0_53, %c0_54] : memref<4x8x8xbf16, #tpu.memory_space<vmem>>, vector<1x8x8xbf16>
    %101 = vector.shape_cast %100 : vector<1x8x8xbf16> to vector<8x8xbf16>
    %102 = arith.extf %101 : vector<8x8xbf16> to vector<8x8xf32>
    %103 = arith.addf %99, %102 : vector<8x8xf32>
    %cst_55 = arith.constant dense<0xFF800000> : vector<8xf32>
    %104 = vector.multi_reduction <maximumf>, %103, %cst_55 [1] : vector<8x8xf32> to vector<8xf32>
    %105 = vector.shape_cast %104 : vector<8xf32> to vector<8x1xf32>
    %106 = vector.broadcast %105 : vector<8x1xf32> to vector<8x8xf32>
    %107 = arith.subf %103, %106 : vector<8x8xf32>
    %108 = math.exp %107 : vector<8x8xf32>
    %cst_56 = arith.constant dense<0.000000e+00> : vector<8xf32>
    %109 = vector.multi_reduction <add>, %108, %cst_56 [1] : vector<8x8xf32> to vector<8xf32>
    %110 = vector.shape_cast %109 : vector<8xf32> to vector<8x1xf32>
    %111 = tpu.reciprocal %110 {approx = true} : vector<8x1xf32> -> vector<8x1xf32>
    %112 = vector.broadcast %111 : vector<8x1xf32> to vector<8x8xf32>
    %113 = arith.mulf %108, %112 : vector<8x8xf32>
    %114 = arith.truncf %113 : vector<8x8xf32> to vector<8x8xbf16>
    %cst_57 = arith.constant dense<0.000000e+00> : vector<8x48xf32>
    %115 = tpu.matmul %114, %98, %cst_57 {dimension_numbers = #tpu.dot_dimension_numbers<[1], [0], [0], [1], [0, 0, 1, 1], [], []>} : vector<8x8xbf16>, vector<8x48xbf16>, vector<8x48xf32> -> vector<8x48xf32>
    %c0_58 = arith.constant 0 : index
    %c0_59 = arith.constant 0 : index
    %116 = vector.load %arg7[%c0_58, %c0_59] : memref<8x192xf32, #tpu.memory_space<vmem>>, vector<8x192xf32>
    %117 = arith.truncf %115 : vector<8x48xf32> to vector<8x48xbf16>
    %c3_60 = arith.constant 3 : index
    %c0_61 = arith.constant 0 : index
    %c0_62 = arith.constant 0 : index
    %118 = vector.load %arg4[%c3_60, %c0_61, %c0_62] : memref<4x48x192xbf16, #tpu.memory_space<vmem>>, vector<1x48x192xbf16>
    %119 = vector.shape_cast %118 : vector<1x48x192xbf16> to vector<48x192xbf16>
    %cst_63 = arith.constant dense<0.000000e+00> : vector<8x192xf32>
    %120 = tpu.matmul %117, %119, %cst_63 {dimension_numbers = #tpu.dot_dimension_numbers<[1], [0], [0], [1], [0, 0, 1, 1], [], []>} : vector<8x48xbf16>, vector<48x192xbf16>, vector<8x192xf32> -> vector<8x192xf32>
    %121 = arith.addf %116, %120 : vector<8x192xf32>
    %c0_64 = arith.constant 0 : index
    %c0_65 = arith.constant 0 : index
    %122 = vector.load %arg7[%c0_64, %c0_65] : memref<8x192xf32, #tpu.memory_space<vmem>>, vector<8x192xf32>
    tpu.vector_store %arg7[%c0_64, %c0_65], %121 {strides = array<i32>} : memref<8x192xf32, #tpu.memory_space<vmem>>, vector<8x192xf32>,
    %c0_66 = arith.constant 0 : index
    %c0_67 = arith.constant 0 : index
    %123 = vector.load %arg7[%c0_66, %c0_67] : memref<8x192xf32, #tpu.memory_space<vmem>>, vector<8x192xf32>
    %124 = vector.broadcast %6 : vector<1x192xf32> to vector<8x192xf32>
    %125 = arith.addf %123, %124 : vector<8x192xf32>
    %c0_68 = arith.constant 0 : index
    %c0_69 = arith.constant 0 : index
    %c0_70 = arith.constant 0 : index
    %126 = vector.load %arg6[%c0_68, %c0_69, %c0_70] : memref<1x8x192xf32, #tpu.memory_space<vmem>>, vector<1x8x192xf32>
    %127 = vector.shape_cast %126 : vector<1x8x192xf32> to vector<8x192xf32>
    %128 = vector.shape_cast %125 : vector<8x192xf32> to vector<1x8x192xf32>
    tpu.vector_store %arg6[%c0_68, %c0_69, %c0_70], %128 {strides = array<i32>} : memref<1x8x192xf32, #tpu.memory_space<vmem>>, vector<1x8x192xf32>,
    return
  }
  func.func @transform_0(%arg0: i32) -> (i32, i32, i32) {
    %c0_i32 = arith.constant 0 : i32
    %c0_i32_0 = arith.constant 0 : i32
    %c0_i32_1 = arith.constant 0 : i32
    return %arg0, %c0_i32, %c0_i32_0 : i32, i32, i32
  }
  func.func @transform_1(%arg0: i32) -> (i32, i32) {
    %c0_i32 = arith.constant 0 : i32
    %c0_i32_0 = arith.constant 0 : i32
    %c0_i32_1 = arith.constant 0 : i32
    return %c0_i32, %c0_i32_0 : i32, i32
  }
  func.func @transform_2(%arg0: i32) -> (i32, i32, i32) {
    %c0_i32 = arith.constant 0 : i32
    %c0_i32_0 = arith.constant 0 : i32
    %c0_i32_1 = arith.constant 0 : i32
    %c0_i32_2 = arith.constant 0 : i32
    return %c0_i32, %c0_i32_0, %c0_i32_1 : i32, i32, i32
  }
  func.func @transform_3(%arg0: i32) -> (i32, i32, i32) {
    %c0_i32 = arith.constant 0 : i32
    %c0_i32_0 = arith.constant 0 : i32
    %c0_i32_1 = arith.constant 0 : i32
    %c0_i32_2 = arith.constant 0 : i32
    return %c0_i32, %c0_i32_0, %c0_i32_1 : i32, i32, i32
  }
  func.func @transform_4(%arg0: i32) -> (i32, i32) {
    %c0_i32 = arith.constant 0 : i32
    %c0_i32_0 = arith.constant 0 : i32
    %c0_i32_1 = arith.constant 0 : i32
    return %c0_i32, %c0_i32_0 : i32, i32
  }
  func.func @transform_5(%arg0: i32) -> (i32, i32, i32) {
    %c0_i32 = arith.constant 0 : i32
    %c0_i32_0 = arith.constant 0 : i32
    %c0_i32_1 = arith.constant 0 : i32
    return %arg0, %c0_i32, %c0_i32_0 : i32, i32, i32
  }
}

</mosaic_0001>

<llo_original>
// kernel: tpu_custom_call.1
$region0: #{tpu_custom_call.1}
  #allocation0 [shape = 'u32[]', space=smem, size = 0x4, offset = 0x4, fixed_abs, tag = 'smem constant byte address 0x4 - core index']
  #allocation1 [shape = 'u32[72,128]{1,0:T(1,128)}', space=vmem, size = 0x9000, scoped, tag = 'internal scratch']
  #allocation2 [shape = 'f32[8,192]{1,0:T(8,128)}', space=vmem, size = 0x2000, scoped, tag = 'scratch operand']
  %s0 = inlined_call_operand.hbm [shape: bf16[2,8,192], index: 0, kind: input, shape index: {}]
  %s1 = inlined_call_operand.hbm [shape: bf16[192,576], index: 1, kind: input, shape index: {}]
  %s2 = inlined_call_operand.hbm [shape: bf16[4,8,8], index: 2, kind: input, shape index: {}]
  %s3 = inlined_call_operand.hbm [shape: bf16[4,48,192], index: 3, kind: input, shape index: {}]
  %s4 = inlined_call_operand.vmem [shape: f32[1,192], index: 4, kind: input, shape index: {}]
  %s5 = inlined_call_operand.hbm [shape: f32[2,8,192], index: 5, kind: output, shape index: {}]
  %s6 = sld [smem:[#allocation0]]
  $region69: #{tpu_custom_call.1} parent=0
    _
  %s8 = ssub.s32 1, %s6
  %s9 = scalar_select 0, %s8, %s6
  $region1: #{tpu_custom_call.1} parent=0
    #allocation3 [shape = 'u8[8192]{0}', space=vmem, size = 0x2000, scoped, tag = 'input window, operand 0']
    #allocation4 [shape = 's32[2]{0}', space=sflag, size = 0x8, scoped, tag = 'scoped memory for tpu_custom_call.1']
    #allocation5 [shape = 's32[2]{0}', space=sflag, size = 0x8, scoped, tag = 'scoped memory for tpu_custom_call.1']
    #allocation6 [shape = 'u8[245760]{0}', space=vmem, size = 0x3c000, scoped, tag = 'input window, operand 1, single buffered']
    #allocation7 [shape = 's32[1]{0}', space=sflag, size = 0x4, scoped, tag = 'scoped memory for tpu_custom_call.1']
    #allocation8 [shape = 'u8[8192]{0}', space=vmem, size = 0x2000, scoped, tag = 'input window, operand 2, single buffered']
    #allocation9 [shape = 'u8[98304]{0}', space=vmem, size = 0x18000, scoped, tag = 'input window, operand 3, single buffered']
    #allocation10 [shape = 's32[1]{0}', space=sflag, size = 0x4, scoped, tag = 'scoped memory for tpu_custom_call.1']
    #allocation11 [shape = 'u8[16384]{0}', space=vmem, size = 0x4000, scoped, tag = 'output window, operand 0']
    %10 = vsyncpa [#allocation4], 0
    %s11 = scalar_lea.sflag [#allocation4], 1
    %12 = vsyncpa %s11, 0
    %13 = vsyncpa [#allocation7], 0
    %14 = vsyncpa [#allocation10], 0
    %15 = vsyncpa [#allocation5], 0
    %s16 = scalar_lea.sflag [#allocation5], 1
    %17 = vsyncpa %s16, 0
    loop: start=0, step=1, limit=4
    $region2: #{tpu_custom_call.1} parent=1 // loop_pre_header
      _
    $region3: #{tpu_custom_call.1} parent=1 // loop_header
      %s19 = sphi 0, %s23
      %p20 = scmp.ge.s32.totalorder %s19, 4
      %s29 = sphi 0, %s31
      %s32 = sphi 0, %s29
      %s33 = sphi 0, %s32
      %s49 = sphi 0, %s33
      %s53 = sphi 0, %s53
      %s55 = sphi 0, %s53
      %s56 = sphi 0, %s55
      %s70 = sphi 0, %s56
      %s74 = sphi 0, %s74
      %s76 = sphi 0, %s74
      %s77 = sphi 0, %s76
      %s91 = sphi 0, %s77
      %s95 = sphi 0, %s95
      %s97 = sphi 0, %s95
      %s98 = sphi 0, %s97
      %s112 = sphi 0, %s98
      %s116 = sphi 0, %s116
      %s118 = sphi 0, %s116
      %s119 = sphi 0, %s118
      %s133 = sphi 0, %s119
      %s139 = sphi 0, %s141
      %s142 = sphi 0, %s139
      %s143 = sphi 0, %s142
      %s159 = sphi 0, %s143
    $region4: #{tpu_custom_call.1} parent=1 // loop_header_branch
      %22 = sbr.rel (%p20) target = $region8
    $region5: #{tpu_custom_call.1} parent=1 // loop_body
      %s24 = ssub.s32 %s19, 1
      %s25 = ssub.s32 %s19, 2
      %s26 = sadd.s32 %s19, 1
      %s27 = ssub.s32 %s19, %s26
      %p28 = scmp.eq.s32.totalorder %s27, 0
      %s30 = sadd.s32 %s29, 1
      %s31 = scalar_select %p28, %s29, %s30
      %p34 = pneg %p28
      %p35 = scmp.eq.s32.totalorder %s19, 1
      %p36 = por %p34, %p35
      %p37 = scmp.ne.s32.totalorder %s29, %s32
      %p38 = scmp.eq.s32.totalorder %s19, 0
      %p39 = por %p37, %p38
      %p40 = scmp.ne.s32.totalorder %s29, %s32
      %p41 = scmp.eq.s32.totalorder %s24, 1
      %p42 = por %p40, %p41
      %p43 = scmp.ne.s32.totalorder %s32, %s33
      %p44 = scmp.eq.s32.totalorder %s24, 0
      %p45 = por %p43, %p44
      %p46 = scmp.ne.s32.totalorder %s32, %s33
      %p47 = scmp.eq.s32.totalorder %s25, 1
      %p48 = por %p46, %p47
      %p50 = scmp.ne.s32.totalorder %s33, %s49
      %p51 = scmp.eq.s32.totalorder %s25, 0
      %p52 = por %p50, %p51
      %s54 = sadd.s32 %s53, 1
      %p57 = scmp.eq.s32.totalorder %s19, 1
      %p58 = scmp.ne.s32.totalorder %s53, %s55
      %p59 = scmp.eq.s32.totalorder %s19, 0
      %p60 = por %p58, %p59
      %p61 = scmp.ne.s32.totalorder %s53, %s55
      %p62 = scmp.eq.s32.totalorder %s24, 1
      %p63 = por %p61, %p62
      %p64 = scmp.ne.s32.totalorder %s55, %s56
      %p65 = scmp.eq.s32.totalorder %s24, 0
      %p66 = por %p64, %p65
      %p67 = scmp.ne.s32.totalorder %s55, %s56
      %p68 = scmp.eq.s32.totalorder %s25, 1
      %p69 = por %p67, %p68
      %p71 = scmp.ne.s32.totalorder %s56, %s70
      %p72 = scmp.eq.s32.totalorder %s25, 0
      %p73 = por %p71, %p72
      %s75 = sadd.s32 %s74, 1
      %p78 = scmp.eq.s32.totalorder %s19, 1
      %p79 = scmp.ne.s32.totalorder %s74, %s76
      %p80 = scmp.eq.s32.totalorder %s19, 0
      %p81 = por %p79, %p80
      %p82 = scmp.ne.s32.totalorder %s74, %s76
      %p83 = scmp.eq.s32.totalorder %s24, 1
      %p84 = por %p82, %p83
      %p85 = scmp.ne.s32.totalorder %s76, %s77
      %p86 = scmp.eq.s32.totalorder %s24, 0
      %p87 = por %p85, %p86
      %p88 = scmp.ne.s32.totalorder %s76, %s77
      %p89 = scmp.eq.s32.totalorder %s25, 1
      %p90 = por %p88, %p89
      %p92 = scmp.ne.s32.totalorder %s77, %s91
      %p93 = scmp.eq.s32.totalorder %s25, 0
      %p94 = por %p92, %p93
      %s96 = sadd.s32 %s95, 1
      %p99 = scmp.eq.s32.totalorder %s19, 1
      %p100 = scmp.ne.s32.totalorder %s95, %s97
      %p101 = scmp.eq.s32.totalorder %s19, 0
      %p102 = por %p100, %p101
      %p103 = scmp.ne.s32.totalorder %s95, %s97
      %p104 = scmp.eq.s32.totalorder %s24, 1
      %p105 = por %p103, %p104
      %p106 = scmp.ne.s32.totalorder %s97, %s98
      %p107 = scmp.eq.s32.totalorder %s24, 0
      %p108 = por %p106, %p107
      %p109 = scmp.ne.s32.totalorder %s97, %s98
      %p110 = scmp.eq.s32.totalorder %s25, 1
      %p111 = por %p109, %p110
      %p113 = scmp.ne.s32.totalorder %s98, %s112
      %p114 = scmp.eq.s32.totalorder %s25, 0
      %p115 = por %p113, %p114
      %s117 = sadd.s32 %s116, 1
      %p120 = scmp.eq.s32.totalorder %s19, 1
      %p121 = scmp.ne.s32.totalorder %s116, %s118
      %p122 = scmp.eq.s32.totalorder %s19, 0
      %p123 = por %p121, %p122
      %p124 = scmp.ne.s32.totalorder %s116, %s118
      %p125 = scmp.eq.s32.totalorder %s24, 1
      %p126 = por %p124, %p125
      %p127 = scmp.ne.s32.totalorder %s118, %s119
      %p128 = scmp.eq.s32.totalorder %s24, 0
      %p129 = por %p127, %p128
      %p130 = scmp.ne.s32.totalorder %s118, %s119
      %p131 = scmp.eq.s32.totalorder %s25, 1
      %p132 = por %p130, %p131
      %p134 = scmp.ne.s32.totalorder %s119, %s133
      %p135 = scmp.eq.s32.totalorder %s25, 0
      %p136 = por %p134, %p135
      %s137 = ssub.s32 %s19, %s26
      %p138 = scmp.eq.s32.totalorder %s137, 0
      %s140 = sadd.s32 %s139, 1
      %s141 = scalar_select %p138, %s139, %s140
      %p144 = pneg %p138
      %p145 = scmp.eq.s32.totalorder %s19, 1
      %p146 = por %p144, %p145
      %p147 = scmp.ne.s32.totalorder %s139, %s142
      %p148 = scmp.eq.s32.totalorder %s19, 0
      %p149 = por %p147, %p148
      %p150 = scmp.ne.s32.totalorder %s139, %s142
      %p151 = scmp.eq.s32.totalorder %s24, 1
      %p152 = por %p150, %p151
      %p153 = scmp.ne.s32.totalorder %s142, %s143
      %p154 = scmp.eq.s32.totalorder %s24, 0
      %p155 = por %p153, %p154
      %p156 = scmp.ne.s32.totalorder %s142, %s143
      %p157 = scmp.eq.s32.totalorder %s25, 1
      %p158 = por %p156, %p157
      %p160 = scmp.ne.s32.totalorder %s143, %s159
      %p161 = scmp.eq.s32.totalorder %s25, 0
      %p162 = por %p160, %p161
      %p163 = scmp.le.s32.totalorder 1, %s19
      %p164 = scmp.lt.s32.totalorder %s19, 3
      %p165 = pnand %p163, %p164
      %p166 = pneg %p165
      // Predicated region
      $region9: #{tpu_custom_call.1} parent=5 // pred_check
        _
      $region10: #{tpu_custom_call.1} parent=5 // pred_check_branch
        %168 = sbr.rel (%p165) target = $region12
      $region11: #{tpu_custom_call.1} parent=5 // pred_region
        %s169 = ssub.s32 %s19, 1
        // Predicated region
        $region13: #{tpu_custom_call.1} parent=11 // pred_check
          %p170 = pneg %p66
        $region14: #{tpu_custom_call.1} parent=11 // pred_check_branch
          %172 = sbr.rel (%p170) target = $region16
        $region15: #{tpu_custom_call.1} parent=11 // pred_region
          %174 = vsyncadd [#allocation7], 0
          %s175 = sshll.u32 %s1, 4
          %s176 = int_to_ptr.hbm [resolvable:$true] %s175
          %s177 = sshll.u32 [#allocation6], 4
          %s178 = int_to_ptr.vmem [resolvable:$true] %s177
          %183 = dma.hbm_to_vmem [thread:$0]  %s176, 7680, %s178, [#allocation7], 320, 320, 20
        $region16: #{tpu_custom_call.1} parent=11 // pred_fallthru
          _
        // Predicated region
        $region17: #{tpu_custom_call.1} parent=11 // pred_check
          %p184 = pneg %p87
        $region18: #{tpu_custom_call.1} parent=11 // pred_check_branch
          %186 = sbr.rel (%p184) target = $region20
        $region19: #{tpu_custom_call.1} parent=11 // pred_region
          %188 = vsyncadd [#allocation7], 0
          %s189 = sshll.u32 %s2, 4
          %s190 = int_to_ptr.hbm [resolvable:$true] %s189
          %s191 = sshll.u32 [#allocation8], 4
          %s192 = int_to_ptr.vmem [resolvable:$true] %s191
          %197 = dma.hbm_to_vmem [thread:$0]  %s190, 256, %s192, [#allocation7], 64, 64, 4
        $region20: #{tpu_custom_call.1} parent=11 // pred_fallthru
          _
        // Predicated region
        $region21: #{tpu_custom_call.1} parent=11 // pred_check
          %p198 = pneg %p108
        $region22: #{tpu_custom_call.1} parent=11 // pred_check_branch
          %200 = sbr.rel (%p198) target = $region24
        $region23: #{tpu_custom_call.1} parent=11 // pred_region
          %202 = vsyncadd [#allocation10], 0
          %s203 = sshll.u32 %s3, 4
          %s204 = int_to_ptr.hbm [resolvable:$true] %s203
          %s205 = sshll.u32 [#allocation9], 4
          %s206 = int_to_ptr.vmem [resolvable:$true] %s205
          %211 = dma.hbm_to_vmem [thread:$0]  %s204, 3072, %s206, [#allocation10], 128, 128, 8
        $region24: #{tpu_custom_call.1} parent=11 // pred_fallthru
          _
        // Predicated region
        $region25: #{tpu_custom_call.1} parent=11 // pred_check
          %p212 = pneg %p129
        $region26: #{tpu_custom_call.1} parent=11 // pred_check_branch
          %214 = sbr.rel (%p212) target = $region28
        $region27: #{tpu_custom_call.1} parent=11 // pred_region
          _
        $region28: #{tpu_custom_call.1} parent=11 // pred_fallthru
          _
      $region12: #{tpu_custom_call.1} parent=5 // pred_fallthru
        _
      %p215 = scmp.lt.s32.totalorder %s19, 2
      // Predicated region
      $region29: #{tpu_custom_call.1} parent=5 // pred_check
        %p216 = pneg %p215
      $region30: #{tpu_custom_call.1} parent=5 // pred_check_branch
        %218 = sbr.rel (%p216) target = $region32
      $region31: #{tpu_custom_call.1} parent=5 // pred_region
        // Predicated region
        $region33: #{tpu_custom_call.1} parent=31 // pred_check
          %p219 = pneg %p39
        $region34: #{tpu_custom_call.1} parent=31 // pred_check_branch
          %221 = sbr.rel (%p219) target = $region36
        $region35: #{tpu_custom_call.1} parent=31 // pred_region
          %s222 = sand.u32 %s29, 1
          %s223 = scalar_lea.sflag [#allocation4], %s222
          %s224 = sand.u32 %s29, 1
          %s225 = smul.addr %s224, 8
          %s226 = scalar_lea.vmem [#allocation3], %s225
          %228 = vsyncadd %s223, 0
          %s229 = smul.addr %s19, 2
          %s230 = smul.addr %s229, 4
          %s231 = scalar_lea.hbm %s0, %s230
          %s233 = sshll.u32 %s231, 4
          %s234 = int_to_ptr.hbm [resolvable:$true] %s233
          %s235 = sshll.u32 %s226, 4
          %s236 = int_to_ptr.vmem [resolvable:$true] %s235
          %238 = dma.hbm_to_vmem [thread:$0]  %s234, 128, %s236, %s223
        $region36: #{tpu_custom_call.1} parent=31 // pred_fallthru
          _
      $region32: #{tpu_custom_call.1} parent=5 // pred_fallthru
        _
      %p239 = scmp.le.s32.totalorder 1, %s19
      %p240 = scmp.lt.s32.totalorder %s19, 3
      %p241 = pnand %p239, %p240
      %p242 = pneg %p241
      // Predicated region
      $region37: #{tpu_custom_call.1} parent=5 // pred_check
        _
      $region38: #{tpu_custom_call.1} parent=5 // pred_check_branch
        %244 = sbr.rel (%p241) target = $region40
      $region39: #{tpu_custom_call.1} parent=5 // pred_region
        %s245 = ssub.s32 %s19, 1
        %s246 = sand.u32 %s32, 1
        %s247 = scalar_lea.sflag [#allocation4], %s246
        %s248 = sand.u32 %s32, 1
        %s249 = smul.addr %s248, 8
        %s250 = scalar_lea.vmem [#allocation3], %s249
        // Predicated region
        $region41: #{tpu_custom_call.1} parent=39 // pred_check
          %p251 = pneg %p45
        $region42: #{tpu_custom_call.1} parent=39 // pred_check_branch
          %253 = sbr.rel (%p251) target = $region44
        $region43: #{tpu_custom_call.1} parent=39 // pred_region
          %255 = dma.done %s247, 128
        $region44: #{tpu_custom_call.1} parent=39 // pred_fallthru
          _
        // Predicated region
        $region45: #{tpu_custom_call.1} parent=39 // pred_check
          %p256 = pneg %p66
        $region46: #{tpu_custom_call.1} parent=39 // pred_check_branch
          %258 = sbr.rel (%p256) target = $region48
        $region47: #{tpu_custom_call.1} parent=39 // pred_region
          %260 = dma.done [#allocation7], 7680
        $region48: #{tpu_custom_call.1} parent=39 // pred_fallthru
          _
        // Predicated region
        $region49: #{tpu_custom_call.1} parent=39 // pred_check
          %p261 = pneg %p87
        $region50: #{tpu_custom_call.1} parent=39 // pred_check_branch
          %263 = sbr.rel (%p261) target = $region52
        $region51: #{tpu_custom_call.1} parent=39 // pred_region
          %265 = dma.done [#allocation7], 256
        $region52: #{tpu_custom_call.1} parent=39 // pred_fallthru
          _
        // Predicated region
        $region53: #{tpu_custom_call.1} parent=39 // pred_check
          %p266 = pneg %p108
        $region54: #{tpu_custom_call.1} parent=39 // pred_check_branch
          %268 = sbr.rel (%p266) target = $region56
        $region55: #{tpu_custom_call.1} parent=39 // pred_region
          %270 = dma.done [#allocation10], 3072
        $region56: #{tpu_custom_call.1} parent=39 // pred_fallthru
          _
        %s271 = sand.u32 %s32, 1
        %s272 = scalar_lea.sflag [#allocation4], %s271
        %s273 = sand.u32 %s32, 1
        %s274 = smul.addr %s273, 8
        %s275 = scalar_lea.vmem [#allocation3], %s274
        %p276 = pneg %p45
        %p277 = pneg %p42
        %p278 = pneg %p66
        %p279 = pneg %p63
        %p280 = pneg %p87
        %p281 = pneg %p84
        %p282 = pneg %p108
        %p283 = pneg %p105
        %p284 = pneg %p129
        %p285 = pneg %p126
        %p286 = pneg %p155
        %p287 = pneg %p152
        %s288 = sand.u32 %s142, 1
        %s289 = scalar_lea.sflag [#allocation5], %s288
        %s290 = sand.u32 %s142, 1
        %s291 = smul.addr %s290, 16
        %s292 = scalar_lea.vmem [#allocation11], %s291
        %v294 = vld [vmem:[%s250] sm:$0xff]
        %v295 = vld [vmem:[#allocation6] sm:$0xff]
        %v296 = vld [vmem:[#allocation6 + $0x8] sm:$0xff]
        %v297 = vld [vmem:[#allocation6 + $0x10] sm:$0xf]
        %v298 = vld [vmem:[#allocation6 + $0x14] sm:$0xff]
        %v299 = vld [vmem:[#allocation6 + $0x1c] sm:$0xff]
        %v300 = vld [vmem:[#allocation6 + $0x24] sm:$0xf]
        %v301 = vld [vmem:[#allocation6 + $0x28] sm:$0xff]
        %v302 = vld [vmem:[#allocation6 + $0x30] sm:$0xff]
        %v303 = vld [vmem:[#allocation6 + $0x38] sm:$0xf]
        %v304 = vld [vmem:[#allocation6 + $0x3c] sm:$0xff]
        %v305 = vld [vmem:[#allocation6 + $0x44] sm:$0xff]
        %v306 = vld [vmem:[#allocation6 + $0x4c] sm:$0xf]
        %v307 = vld [vmem:[#allocation6 + $0x50] sm:$0xff]
        %v308 = vld [vmem:[#allocation6 + $0x58] sm:$0xff]
        %v309 = vld [vmem:[#allocation6 + $0x60] sm:$0xf]
        %v310 = vld [vmem:[#allocation6 + $0x64] sm:$0xff]
        %v311 = vld [vmem:[#allocation6 + $0x6c] sm:$0xff]
        %v312 = vld [vmem:[#allocation6 + $0x74] sm:$0xf]
        %v313 = vld [vmem:[#allocation6 + $0x78] sm:$0xff]
        %v314 = vld [vmem:[#allocation6 + $0x80] sm:$0xff]
        %v315 = vld [vmem:[#allocation6 + $0x88] sm:$0xf]
        %v316 = vld [vmem:[#allocation6 + $0x8c] sm:$0xff]
        %v317 = vld [vmem:[#allocation6 + $0x94] sm:$0xff]
        %v318 = vld [vmem:[#allocation6 + $0x9c] sm:$0xf]
        %v319 = vld [vmem:[#allocation6 + $0xa0] sm:$0xff]
        %v320 = vld [vmem:[#allocation6 + $0xa8] sm:$0xff]
        %v321 = vld [vmem:[#allocation6 + $0xb0] sm:$0xf]
        %v322 = vld [vmem:[#allocation6 + $0xb4] sm:$0xff]
        %v323 = vld [vmem:[#allocation6 + $0xbc] sm:$0xff]
        %v324 = vld [vmem:[#allocation6 + $0xc4] sm:$0xf]
        %v325 = vld [vmem:[#allocation6 + $0xc8] sm:$0xff]
        %v326 = vld [vmem:[#allocation6 + $0xd0] sm:$0xff]
        %v327 = vld [vmem:[#allocation6 + $0xd8] sm:$0xf]
        %v328 = vld [vmem:[#allocation6 + $0xdc] sm:$0xff]
        %v329 = vld [vmem:[#allocation6 + $0xe4] sm:$0xff]
        %v330 = vld [vmem:[#allocation6 + $0xec] sm:$0xf]
        %v331 = vld [vmem:[#allocation6 + $0xf0] sm:$0xff]
        %v332 = vld [vmem:[#allocation6 + $0xf8] sm:$0xff]
        %v333 = vld [vmem:[#allocation6 + $0x100] sm:$0xf]
        %v334 = vld [vmem:[#allocation6 + $0x104] sm:$0xff]
        %v335 = vld [vmem:[#allocation6 + $0x10c] sm:$0xff]
        %v336 = vld [vmem:[#allocation6 + $0x114] sm:$0xf]
        %v337 = vld [vmem:[#allocation6 + $0x118] sm:$0xff]
        %v338 = vld [vmem:[#allocation6 + $0x120] sm:$0xff]
        %v339 = vld [vmem:[#allocation6 + $0x128] sm:$0xf]
        %v340 = vld [vmem:[#allocation6 + $0x12c] sm:$0xff]
        %v341 = vld [vmem:[#allocation6 + $0x134] sm:$0xff]
        %v342 = vld [vmem:[#allocation6 + $0x13c] sm:$0xf]
        %v343 = vld [vmem:[#allocation6 + $0x140] sm:$0xff]
        %v344 = vld [vmem:[#allocation6 + $0x148] sm:$0xff]
        %v345 = vld [vmem:[#allocation6 + $0x150] sm:$0xf]
        %v346 = vld [vmem:[#allocation6 + $0x154] sm:$0xff]
        %v347 = vld [vmem:[#allocation6 + $0x15c] sm:$0xff]
        %v348 = vld [vmem:[#allocation6 + $0x164] sm:$0xf]
        %v349 = vld [vmem:[#allocation6 + $0x168] sm:$0xff]
        %v350 = vld [vmem:[#allocation6 + $0x170] sm:$0xff]
        %v351 = vld [vmem:[#allocation6 + $0x178] sm:$0xf]
        %v352 = vld [vmem:[#allocation6 + $0x17c] sm:$0xff]
        %v353 = vld [vmem:[#allocation6 + $0x184] sm:$0xff]
        %v354 = vld [vmem:[#allocation6 + $0x18c] sm:$0xf]
        %v355 = vld [vmem:[#allocation6 + $0x190] sm:$0xff]
        %v356 = vld [vmem:[#allocation6 + $0x198] sm:$0xff]
        %v357 = vld [vmem:[#allocation6 + $0x1a0] sm:$0xf]
        %v358 = vld [vmem:[#allocation6 + $0x1a4] sm:$0xff]
        %v359 = vld [vmem:[#allocation6 + $0x1ac] sm:$0xff]
        %v360 = vld [vmem:[#allocation6 + $0x1b4] sm:$0xf]
        %v361 = vld [vmem:[#allocation6 + $0x1b8] sm:$0xff]
        %v362 = vld [vmem:[#allocation6 + $0x1c0] sm:$0xff]
        %v363 = vld [vmem:[#allocation6 + $0x1c8] sm:$0xf]
        %v364 = vld [vmem:[#allocation6 + $0x1cc] sm:$0xff]
        %v365 = vld [vmem:[#allocation6 + $0x1d4] sm:$0xff]
        %v366 = vld [vmem:[#allocation6 + $0x1dc] sm:$0xf]
        %v368 = vunpack.c.l.b16 %v294
        %v369 = vunpack.c.h.b16 %v294
        %v370 = vpack.c.b16 %v368, %v368
        %v371 = vpack.c.b16 %v369, %v369
        %v445 = vunpack.c.l.b16 %v295
        %v446 = vunpack.c.h.b16 %v295
        %v447 = vunpack.c.l.b16 %v296
        %v448 = vunpack.c.h.b16 %v296
        %v449 = vunpack.c.l.b16 %v297
        %v450 = vunpack.c.l.b16 %v298
        %v451 = vunpack.c.h.b16 %v298
        %v452 = vunpack.c.l.b16 %v299
        %v453 = vunpack.c.h.b16 %v299
        %v454 = vunpack.c.l.b16 %v300
        %v455 = vunpack.c.l.b16 %v301
        %v456 = vunpack.c.h.b16 %v301
        %v457 = vunpack.c.l.b16 %v302
        %v458 = vunpack.c.h.b16 %v302
        %v459 = vunpack.c.l.b16 %v303
        %v460 = vunpack.c.l.b16 %v304
        %v461 = vunpack.c.h.b16 %v304
        %v462 = vunpack.c.l.b16 %v305
        %v463 = vunpack.c.h.b16 %v305
        %v464 = vunpack.c.l.b16 %v306
        %v465 = vunpack.c.l.b16 %v307
        %v466 = vunpack.c.h.b16 %v307
        %v467 = vunpack.c.l.b16 %v308
        %v468 = vunpack.c.h.b16 %v308
        %v469 = vunpack.c.l.b16 %v309
        %v470 = vunpack.c.l.b16 %v310
        %v471 = vunpack.c.h.b16 %v310
        %v472 = vunpack.c.l.b16 %v311
        %v473 = vunpack.c.h.b16 %v311
        %v474 = vunpack.c.l.b16 %v312
        %v475 = vunpack.c.l.b16 %v313
        %v476 = vunpack.c.h.b16 %v313
        %v477 = vunpack.c.l.b16 %v314
        %v478 = vunpack.c.h.b16 %v314
        %v479 = vunpack.c.l.b16 %v315
        %v480 = vunpack.c.l.b16 %v316
        %v481 = vunpack.c.h.b16 %v316
        %v482 = vunpack.c.l.b16 %v317
        %v483 = vunpack.c.h.b16 %v317
        %v484 = vunpack.c.l.b16 %v318
        %v485 = vunpack.c.l.b16 %v319
        %v486 = vunpack.c.h.b16 %v319
        %v487 = vunpack.c.l.b16 %v320
        %v488 = vunpack.c.h.b16 %v320
        %v489 = vunpack.c.l.b16 %v321
        %v490 = vunpack.c.l.b16 %v322
        %v491 = vunpack.c.h.b16 %v322
        %v492 = vunpack.c.l.b16 %v323
        %v493 = vunpack.c.h.b16 %v323
        %v494 = vunpack.c.l.b16 %v324
        %v495 = vunpack.c.l.b16 %v325
        %v496 = vunpack.c.h.b16 %v325
        %v497 = vunpack.c.l.b16 %v326
        %v498 = vunpack.c.h.b16 %v326
        %v499 = vunpack.c.l.b16 %v327
        %v500 = vunpack.c.l.b16 %v328
        %v501 = vunpack.c.h.b16 %v328
        %v502 = vunpack.c.l.b16 %v329
        %v503 = vunpack.c.h.b16 %v329
        %v504 = vunpack.c.l.b16 %v330
        %v505 = vunpack.c.l.b16 %v331
        %v506 = vunpack.c.h.b16 %v331
        %v507 = vunpack.c.l.b16 %v332
        %v508 = vunpack.c.h.b16 %v332
        %v509 = vunpack.c.l.b16 %v333
        %v510 = vunpack.c.l.b16 %v334
        %v511 = vunpack.c.h.b16 %v334
        %v512 = vunpack.c.l.b16 %v335
        %v513 = vunpack.c.h.b16 %v335
        %v514 = vunpack.c.l.b16 %v336
        %v515 = vunpack.c.l.b16 %v337
        %v516 = vunpack.c.h.b16 %v337
        %v517 = vunpack.c.l.b16 %v338
        %v518 = vunpack.c.h.b16 %v338
        %v519 = vunpack.c.l.b16 %v339
        %v520 = vunpack.c.l.b16 %v340
        %v521 = vunpack.c.h.b16 %v340
        %v522 = vunpack.c.l.b16 %v341
        %v523 = vunpack.c.h.b16 %v341
        %v524 = vunpack.c.l.b16 %v342
        %v525 = vunpack.c.l.b16 %v343
        %v526 = vunpack.c.h.b16 %v343
        %v527 = vunpack.c.l.b16 %v344
        %v528 = vunpack.c.h.b16 %v344
        %v529 = vunpack.c.l.b16 %v345
        %v530 = vunpack.c.l.b16 %v346
        %v531 = vunpack.c.h.b16 %v346
        %v532 = vunpack.c.l.b16 %v347
        %v533 = vunpack.c.h.b16 %v347
        %v534 = vunpack.c.l.b16 %v348
        %v535 = vunpack.c.l.b16 %v349
        %v536 = vunpack.c.h.b16 %v349
        %v537 = vunpack.c.l.b16 %v350
        %v538 = vunpack.c.h.b16 %v350
        %v539 = vunpack.c.l.b16 %v351
        %v540 = vunpack.c.l.b16 %v352
        %v541 = vunpack.c.h.b16 %v352
        %v542 = vunpack.c.l.b16 %v353
        %v543 = vunpack.c.h.b16 %v353
        %v544 = vunpack.c.l.b16 %v354
        %v545 = vunpack.c.l.b16 %v355
        %v546 = vunpack.c.h.b16 %v355
        %v547 = vunpack.c.l.b16 %v356
        %v548 = vunpack.c.h.b16 %v356
        %v549 = vunpack.c.l.b16 %v357
        %v550 = vunpack.c.l.b16 %v358
        %v551 = vunpack.c.h.b16 %v358
        %v552 = vunpack.c.l.b16 %v359
        %v553 = vunpack.c.h.b16 %v359
        %v554 = vunpack.c.l.b16 %v360
        %v555 = vunpack.c.l.b16 %v361
        %v556 = vunpack.c.h.b16 %v361
        %v557 = vunpack.c.l.b16 %v362
        %v558 = vunpack.c.h.b16 %v362
        %v559 = vunpack.c.l.b16 %v363
        %v560 = vunpack.c.l.b16 %v364
        %v561 = vunpack.c.h.b16 %v364
        %v562 = vunpack.c.l.b16 %v365
        %v563 = vunpack.c.h.b16 %v365
        %v564 = vunpack.c.l.b16 %v366
        %v565 = vpack.c.b16 %v450, %v445
        %v566 = vpack.c.b16 %v451, %v446
        %v567 = vpack.c.b16 %v452, %v447
        %v568 = vpack.c.b16 %v453, %v448
        %v569 = vpack.c.b16 %v454, %v449
        %v570 = vpack.c.b16 %v460, %v455
        %v571 = vpack.c.b16 %v461, %v456
        %v572 = vpack.c.b16 %v462, %v457
        %v573 = vpack.c.b16 %v463, %v458
        %v574 = vpack.c.b16 %v464, %v459
        %v575 = vpack.c.b16 %v470, %v465
        %v576 = vpack.c.b16 %v471, %v466
        %v577 = vpack.c.b16 %v472, %v467
        %v578 = vpack.c.b16 %v473, %v468
        %v579 = vpack.c.b16 %v474, %v469
        %v580 = vpack.c.b16 %v480, %v475
        %v581 = vpack.c.b16 %v481, %v476
        %v582 = vpack.c.b16 %v482, %v477
        %v583 = vpack.c.b16 %v483, %v478
        %v584 = vpack.c.b16 %v484, %v479
        %v585 = vpack.c.b16 %v490, %v485
        %v586 = vpack.c.b16 %v491, %v486
        %v587 = vpack.c.b16 %v492, %v487
        %v588 = vpack.c.b16 %v493, %v488
        %v589 = vpack.c.b16 %v494, %v489
        %v590 = vpack.c.b16 %v500, %v495
        %v591 = vpack.c.b16 %v501, %v496
        %v592 = vpack.c.b16 %v502, %v497
        %v593 = vpack.c.b16 %v503, %v498
        %v594 = vpack.c.b16 %v504, %v499
        %v595 = vpack.c.b16 %v510, %v505
        %v596 = vpack.c.b16 %v511, %v506
        %v597 = vpack.c.b16 %v512, %v507
        %v598 = vpack.c.b16 %v513, %v508
        %v599 = vpack.c.b16 %v514, %v509
        %v600 = vpack.c.b16 %v520, %v515
        %v601 = vpack.c.b16 %v521, %v516
        %v602 = vpack.c.b16 %v522, %v517
        %v603 = vpack.c.b16 %v523, %v518
        %v604 = vpack.c.b16 %v524, %v519
        %v605 = vpack.c.b16 %v530, %v525
        %v606 = vpack.c.b16 %v531, %v526
        %v607 = vpack.c.b16 %v532, %v527
        %v608 = vpack.c.b16 %v533, %v528
        %v609 = vpack.c.b16 %v534, %v529
        %v610 = vpack.c.b16 %v540, %v535
        %v611 = vpack.c.b16 %v541, %v536
        %v612 = vpack.c.b16 %v542, %v537
        %v613 = vpack.c.b16 %v543, %v538
        %v614 = vpack.c.b16 %v544, %v539
        %v615 = vpack.c.b16 %v550, %v545
        %v616 = vpack.c.b16 %v551, %v546
        %v617 = vpack.c.b16 %v552, %v547
        %v618 = vpack.c.b16 %v553, %v548
        %v619 = vpack.c.b16 %v554, %v549
        %v620 = vpack.c.b16 %v560, %v555
        %v621 = vpack.c.b16 %v561, %v556
        %v622 = vpack.c.b16 %v562, %v557
        %v623 = vpack.c.b16 %v563, %v558
        %v624 = vpack.c.b16 %v564, %v559
        %vm685 = vcmask 523264
        %v687 = vsel %vm685, %v371, 0
        %689 = vmatpush.bf16.msra.mxu0 %v600
        %690 = vmatpush.bf16.msra.mxu0 %v595
        %691 = vmatpush.bf16.msra.mxu0 %v590
        %692 = vmatpush.bf16.msra.mxu0 %v585
        %693 = vmatpush.bf16.msra.mxu0 %v580
        %694 = vmatpush.bf16.msra.mxu0 %v575
        %695 = vmatpush.bf16.msra.mxu0 %v570
        %696 = vmatpush.bf16.msra.mxu0 %v565
        %697 = vmatmul.bf16.gmra.mxu0 %v370
        %v698 = vpop.f32.mrf.mxu0
        %v699 = vadd.f32 0.0, %v698
        %v700 = vpop.f32.mrf.mxu0
        %701 = vdwg.mxu0
        %702 = vmatpush.bf16.msra.mxu0 0
        %703 = vmatpush.bf16.msra.mxu0 0
        %704 = vmatpush.bf16.msra.mxu0 0
        %705 = vmatpush.bf16.msra.mxu0 0
        %706 = vmatpush.bf16.msra.mxu0 %v620
        %707 = vmatpush.bf16.msra.mxu0 %v615
        %708 = vmatpush.bf16.msra.mxu0 %v610
        %709 = vmatpush.bf16.msra.mxu0 %v605
        %710 = vmatmul.bf16.gmra.mxu0 %v687
        %v711 = vpop.f32.mrf.mxu0
        %v712 = vadd.f32 %v699, %v711
        %v713 = vpop.f32.mrf.mxu0
        %714 = vdwg.mxu0
        %715 = vmatpush.bf16.msra.mxu0 %v601
        %716 = vmatpush.bf16.msra.mxu0 %v596
        %717 = vmatpush.bf16.msra.mxu0 %v591
        %718 = vmatpush.bf16.msra.mxu0 %v586
        %719 = vmatpush.bf16.msra.mxu0 %v581
        %720 = vmatpush.bf16.msra.mxu0 %v576
        %721 = vmatpush.bf16.msra.mxu0 %v571
        %722 = vmatpush.bf16.msra.mxu0 %v566
        %723 = vmatmul.bf16.gmra.mxu0 %v370
        %v724 = vpop.f32.mrf.mxu0
        %v725 = vadd.f32 0.0, %v724
        %v726 = vpop.f32.mrf.mxu0
        %727 = vdwg.mxu0
        %728 = vmatpush.bf16.msra.mxu0 0
        %729 = vmatpush.bf16.msra.mxu0 0
        %730 = vmatpush.bf16.msra.mxu0 0
        %731 = vmatpush.bf16.msra.mxu0 0
        %732 = vmatpush.bf16.msra.mxu0 %v621
        %733 = vmatpush.bf16.msra.mxu0 %v616
        %734 = vmatpush.bf16.msra.mxu0 %v611
        %735 = vmatpush.bf16.msra.mxu0 %v606
        %736 = vmatmul.bf16.gmra.mxu0 %v687
        %v737 = vpop.f32.mrf.mxu0
        %v738 = vadd.f32 %v725, %v737
        %v739 = vpop.f32.mrf.mxu0
        %740 = vdwg.mxu0
        %741 = vmatpush.bf16.msra.mxu0 %v602
        %742 = vmatpush.bf16.msra.mxu0 %v597
        %743 = vmatpush.bf16.msra.mxu0 %v592
        %744 = vmatpush.bf16.msra.mxu0 %v587
        %745 = vmatpush.bf16.msra.mxu0 %v582
        %746 = vmatpush.bf16.msra.mxu0 %v577
        %747 = vmatpush.bf16.msra.mxu0 %v572
        %748 = vmatpush.bf16.msra.mxu0 %v567
        %749 = vmatmul.bf16.gmra.mxu0 %v370
        %v750 = vpop.f32.mrf.mxu0
        %v751 = vadd.f32 0.0, %v750
        %v752 = vpop.f32.mrf.mxu0
        %753 = vdwg.mxu0
        %754 = vmatpush.bf16.msra.mxu0 0
        %755 = vmatpush.bf16.msra.mxu0 0
        %756 = vmatpush.bf16.msra.mxu0 0
        %757 = vmatpush.bf16.msra.mxu0 0
        %758 = vmatpush.bf16.msra.mxu0 %v622
        %759 = vmatpush.bf16.msra.mxu0 %v617
        %760 = vmatpush.bf16.msra.mxu0 %v612
        %761 = vmatpush.bf16.msra.mxu0 %v607
        %762 = vmatmul.bf16.gmra.mxu0 %v687
        %v763 = vpop.f32.mrf.mxu0
        %v764 = vadd.f32 %v751, %v763
        %v765 = vpop.f32.mrf.mxu0
        %766 = vdwg.mxu0
        %767 = vmatpush.bf16.msra.mxu0 %v603
        %768 = vmatpush.bf16.msra.mxu0 %v598
        %769 = vmatpush.bf16.msra.mxu0 %v593
        %770 = vmatpush.bf16.msra.mxu0 %v588
        %771 = vmatpush.bf16.msra.mxu0 %v583
        %772 = vmatpush.bf16.msra.mxu0 %v578
        %773 = vmatpush.bf16.msra.mxu0 %v573
        %774 = vmatpush.bf16.msra.mxu0 %v568
        %775 = vmatmul.bf16.gmra.mxu0 %v370
        %v776 = vpop.f32.mrf.mxu0
        %v777 = vadd.f32 0.0, %v776
        %v778 = vpop.f32.mrf.mxu0
        %779 = vdwg.mxu0
        %780 = vmatpush.bf16.msra.mxu0 0
        %781 = vmatpush.bf16.msra.mxu0 0
        %782 = vmatpush.bf16.msra.mxu0 0
        %783 = vmatpush.bf16.msra.mxu0 0
        %784 = vmatpush.bf16.msra.mxu0 %v623
        %785 = vmatpush.bf16.msra.mxu0 %v618
        %786 = vmatpush.bf16.msra.mxu0 %v613
        %787 = vmatpush.bf16.msra.mxu0 %v608
        %788 = vmatmul.bf16.gmra.mxu0 %v687
        %v789 = vpop.f32.mrf.mxu0
        %v790 = vadd.f32 %v777, %v789
        %v791 = vpop.f32.mrf.mxu0
        %792 = vdwg.mxu0
        %793 = vmatpush.bf16.msra.mxu0 %v604
        %794 = vmatpush.bf16.msra.mxu0 %v599
        %795 = vmatpush.bf16.msra.mxu0 %v594
        %796 = vmatpush.bf16.msra.mxu0 %v589
        %797 = vmatpush.bf16.msra.mxu0 %v584
        %798 = vmatpush.bf16.msra.mxu0 %v579
        %799 = vmatpush.bf16.msra.mxu0 %v574
        %800 = vmatpush.bf16.msra.mxu0 %v569
        %801 = vmatmul.bf16.gmra.mxu0 %v370
        %v802 = vpop.f32.mrf.mxu0
        %v803 = vadd.f32 0.0, %v802
        %v804 = vpop.f32.mrf.mxu0
        %805 = vdwg.mxu0
        %806 = vmatpush.bf16.msra.mxu0 0
        %807 = vmatpush.bf16.msra.mxu0 0
        %808 = vmatpush.bf16.msra.mxu0 0
        %809 = vmatpush.bf16.msra.mxu0 0
        %810 = vmatpush.bf16.msra.mxu0 %v624
        %811 = vmatpush.bf16.msra.mxu0 %v619
        %812 = vmatpush.bf16.msra.mxu0 %v614
        %813 = vmatpush.bf16.msra.mxu0 %v609
        %814 = vmatmul.bf16.gmra.mxu0 %v687
        %v815 = vpop.f32.mrf.mxu0
        %v816 = vadd.f32 %v803, %v815
        %v817 = vpop.f32.mrf.mxu0
        %818 = vdwg.mxu0
        %v819 = vpack.c.bf16 %v738, %v712
        %v820 = vpack.c.bf16 %v790, %v764
        %v821 = vpack.c.bf16 %v816, %v816
        %v822 = vld [vmem:[%s4] sm:$0x3]
        %825 = vrot.lane.b32.xlu0 %v819, 64
        %v826 = vpop.permute.xlu0 %825
        %827 = vrot.lane.b32.xlu0 %v820, 64
        %v828 = vpop.permute.xlu0 %827
        %v829 = vrot.slane %v826, 4
        %v830 = vrot.slane %v828, 4
        %vm831 = vcmask 1043456
        %v832 = vsel %vm831, %v829, %v830
        %vm833 = vcmask 523264
        %v834 = vsel %vm833, %v832, %v828
        %v836 = vrot.slane %v820, 4
        %v837 = vrot.slane %v821, 4
        %v838 = vsel %vm831, %v836, %v837
        %839 = vst [vmem:[#allocation2] sm:$0xff] 0.0
        %840 = vst.msk [vmem:[#allocation2 + $0x8] sm:$0xff] %vm685, 0.0
        %v841 = vld [vmem:[#allocation8] sm:$0xf]
        %v842 = vunpack.c.l.bf16 %v841
        %vm843 = vcmask 392192
        %v845 = vsel %vm843, %v834, 0
        %v848 = vsel %vm843, %v819, 0
        %850 = vmatpush.bf16.xpose.msra.mxu0 0
        %851 = vmatpush.bf16.xpose.msra.mxu0 0
        %852 = vmatpush.bf16.xpose.msra.mxu0 0
        %853 = vmatpush.bf16.xpose.msra.mxu0 0
        %854 = vmatpush.bf16.xpose.msra.mxu0 0
        %855 = vmatpush.bf16.xpose.msra.mxu0 0
        %856 = vmatpush.bf16.xpose.msra.mxu0 0
        %857 = vmatpush.bf16.xpose.msra.mxu0 %v848
        %858 = vmatmul.bf16.gmra.mxu0 %v845
        %v859 = vpop.f32.mrf.mxu0
        %v860 = vadd.f32 %v842, %v859
        %v861 = vpop.f32.mrf.mxu0
        %862 = vdwg.mxu0
        %vm863 = vcmask 64512
        %v864 = vsel %vm863, %v860, -inf
        %865 = vmax.xlane.f32.xlu0 %v864
        %v866 = vpop.xlane.xlu0 %865
        %v867 = vsub.f32 %v860, %v866
        %v868 = vmul.f32 %v867, 1.442695
        %v869 = vpow.pop %v868
        %v870 = vsel %vm863, %v869, 0.0
        %871 = vadd.xlane.f32.xlu0 %v870
        %v872 = vpop.xlane.xlu0 %871
        %v873 = vrcp.pop %v872
        %v874 = vmul.f32 %v869, %v873
        %v875 = vpack.c.bf16 %v874, %v874
        %v877 = vsel %vm863, %v875, 0
        %vm879 = vcmask 1043456
        %v881 = vsel %vm879, %v838, 0
        %883 = vmatpush.bf16.msra.mxu0 0
        %884 = vmatpush.bf16.msra.mxu0 0
        %885 = vmatpush.bf16.msra.mxu0 0
        %886 = vmatpush.bf16.msra.mxu0 0
        %887 = vmatpush.bf16.msra.mxu0 0
        %888 = vmatpush.bf16.msra.mxu0 0
        %889 = vmatpush.bf16.msra.mxu0 0
        %890 = vmatpush.bf16.msra.mxu0 %v881
        %891 = vmatmul.bf16.gmra.mxu0 %v877
        %v892 = vpop.f32.mrf.mxu0
        %v893 = vadd.f32 0.0, %v892
        %v894 = vpop.f32.mrf.mxu0
        %895 = vdwg.mxu0
        %v896 = vld [vmem:[#allocation2] sm:$0xff]
        %v897 = vld [vmem:[#allocation2 + $0x8] sm:$0xff]
        %v898 = vpack.c.bf16 %v893, %v893
        %v899 = vld [vmem:[#allocation9] sm:$0xff]
        %v900 = vld [vmem:[#allocation9 + $0x8] sm:$0xff]
        %v901 = vld [vmem:[#allocation9 + $0x10] sm:$0xff]
        %v902 = vld [vmem:[#allocation9 + $0x18] sm:$0xff]
        %v903 = vld [vmem:[#allocation9 + $0x20] sm:$0xff]
        %v904 = vld [vmem:[#allocation9 + $0x28] sm:$0xff]
        %v911 = vunpack.c.l.b16 %v899
        %v912 = vunpack.c.h.b16 %v899
        %v913 = vunpack.c.l.b16 %v900
        %v914 = vunpack.c.h.b16 %v900
        %v915 = vunpack.c.l.b16 %v901
        %v916 = vunpack.c.h.b16 %v901
        %v917 = vunpack.c.l.b16 %v902
        %v918 = vunpack.c.h.b16 %v902
        %v919 = vunpack.c.l.b16 %v903
        %v920 = vunpack.c.h.b16 %v903
        %v921 = vunpack.c.l.b16 %v904
        %v922 = vunpack.c.h.b16 %v904
        %v923 = vpack.c.b16 %v913, %v911
        %v924 = vpack.c.b16 %v914, %v912
        %v925 = vpack.c.b16 %v917, %v915
        %v926 = vpack.c.b16 %v918, %v916
        %v927 = vpack.c.b16 %v921, %v919
        %v928 = vpack.c.b16 %v922, %v920
        %v936 = vsel %vm843, %v898, 0
        %938 = vmatpush.bf16.msra.mxu0 0
        %939 = vmatpush.bf16.msra.mxu0 0
        %940 = vmatpush.bf16.msra.mxu0 0
        %941 = vmatpush.bf16.msra.mxu0 0
        %942 = vmatpush.bf16.msra.mxu0 0
        %943 = vmatpush.bf16.msra.mxu0 %v927
        %944 = vmatpush.bf16.msra.mxu0 %v925
        %945 = vmatpush.bf16.msra.mxu0 %v923
        %946 = vmatmul.bf16.gmra.mxu0 %v936
        %v947 = vpop.f32.mrf.mxu0
        %v948 = vadd.f32 0.0, %v947
        %v949 = vpop.f32.mrf.mxu0
        %950 = vdwg.mxu0
        %951 = vmatpush.bf16.msra.mxu0 0
        %952 = vmatpush.bf16.msra.mxu0 0
        %953 = vmatpush.bf16.msra.mxu0 0
        %954 = vmatpush.bf16.msra.mxu0 0
        %955 = vmatpush.bf16.msra.mxu0 0
        %956 = vmatpush.bf16.msra.mxu0 %v928
        %957 = vmatpush.bf16.msra.mxu0 %v926
        %958 = vmatpush.bf16.msra.mxu0 %v924
        %959 = vmatmul.bf16.gmra.mxu0 %v936
        %v960 = vpop.f32.mrf.mxu0
        %v961 = vadd.f32 0.0, %v960
        %v962 = vpop.f32.mrf.mxu0
        %963 = vdwg.mxu0
        %v964 = vadd.f32 %v896, %v948
        %v965 = vadd.f32 %v897, %v961
        %966 = vst [vmem:[#allocation2] sm:$0xff] %v964
        %967 = vst.msk [vmem:[#allocation2 + $0x8] sm:$0xff] %vm685, %v965
        %s968 = scalar_lea.vmem [#allocation8], 4
        %v969 = vld [vmem:[%s968] sm:$0xf]
        %v970 = vunpack.c.l.bf16 %v969
        %v971 = vunpack.c.l.b16 %v834
        %v972 = vpack.c.b16 %v971, %v971
        %973 = vrot.lane.b32.xlu0 %v972, 80
        %v974 = vpop.permute.xlu0 %973
        %v975 = vunpack.c.l.b16 %v819
        %v976 = vpack.c.b16 %v975, %v975
        %977 = vrot.lane.b32.xlu0 %v976, 80
        %v978 = vpop.permute.xlu0 %977
        %v980 = vsel %vm843, %v974, 0
        %v983 = vsel %vm843, %v978, 0
        %985 = vmatpush.bf16.xpose.msra.mxu0 0
        %986 = vmatpush.bf16.xpose.msra.mxu0 0
        %987 = vmatpush.bf16.xpose.msra.mxu0 0
        %988 = vmatpush.bf16.xpose.msra.mxu0 0
        %989 = vmatpush.bf16.xpose.msra.mxu0 0
        %990 = vmatpush.bf16.xpose.msra.mxu0 0
        %991 = vmatpush.bf16.xpose.msra.mxu0 0
        %992 = vmatpush.bf16.xpose.msra.mxu0 %v983
        %993 = vmatmul.bf16.gmra.mxu0 %v980
        %v994 = vpop.f32.mrf.mxu0
        %v995 = vadd.f32 %v970, %v994
        %v996 = vpop.f32.mrf.mxu0
        %997 = vdwg.mxu0
        %v998 = vsel %vm863, %v995, -inf
        %999 = vmax.xlane.f32.xlu0 %v998
        %v1000 = vpop.xlane.xlu0 %999
        %v1001 = vsub.f32 %v995, %v1000
        %v1002 = vmul.f32 %v1001, 1.442695
        %v1003 = vpow.pop %v1002
        %v1004 = vsel %vm863, %v1003, 0.0
        %1005 = vadd.xlane.f32.xlu0 %v1004
        %v1006 = vpop.xlane.xlu0 %1005
        %v1007 = vrcp.pop %v1006
        %v1008 = vmul.f32 %v1003, %v1007
        %v1009 = vpack.c.bf16 %v1008, %v1008
        %v1010 = vunpack.c.l.b16 %v838
        %v1011 = vpack.c.b16 %v1010, %v1010
        %1012 = vrot.lane.b32.xlu0 %v1011, 80
        %v1013 = vpop.permute.xlu0 %1012
        %v1015 = vsel %vm863, %v1009, 0
        %v1018 = vsel %vm879, %v1013, 0
        %1020 = vmatpush.bf16.msra.mxu0 0
        %1021 = vmatpush.bf16.msra.mxu0 0
        %1022 = vmatpush.bf16.msra.mxu0 0
        %1023 = vmatpush.bf16.msra.mxu0 0
        %1024 = vmatpush.bf16.msra.mxu0 0
        %1025 = vmatpush.bf16.msra.mxu0 0
        %1026 = vmatpush.bf16.msra.mxu0 0
        %1027 = vmatpush.bf16.msra.mxu0 %v1018
        %1028 = vmatmul.bf16.gmra.mxu0 %v1015
        %v1029 = vpop.f32.mrf.mxu0
        %v1030 = vadd.f32 0.0, %v1029
        %v1031 = vpop.f32.mrf.mxu0
        %1032 = vdwg.mxu0
        %v1033 = vld [vmem:[#allocation2] sm:$0xff]
        %v1034 = vld [vmem:[#allocation2 + $0x8] sm:$0xff]
        %v1035 = vpack.c.bf16 %v1030, %v1030
        %s1036 = scalar_lea.vmem [#allocation9], 48
        %v1037 = vld [vmem:[%s1036] sm:$0xff]
        %v1038 = vld [vmem:[%s1036 + $0x8] sm:$0xff]
        %v1039 = vld [vmem:[%s1036 + $0x10] sm:$0xff]
        %v1040 = vld [vmem:[%s1036 + $0x18] sm:$0xff]
        %v1041 = vld [vmem:[%s1036 + $0x20] sm:$0xff]
        %v1042 = vld [vmem:[%s1036 + $0x28] sm:$0xff]
        %v1049 = vunpack.c.l.b16 %v1037
        %v1050 = vunpack.c.h.b16 %v1037
        %v1051 = vunpack.c.l.b16 %v1038
        %v1052 = vunpack.c.h.b16 %v1038
        %v1053 = vunpack.c.l.b16 %v1039
        %v1054 = vunpack.c.h.b16 %v1039
        %v1055 = vunpack.c.l.b16 %v1040
        %v1056 = vunpack.c.h.b16 %v1040
        %v1057 = vunpack.c.l.b16 %v1041
        %v1058 = vunpack.c.h.b16 %v1041
        %v1059 = vunpack.c.l.b16 %v1042
        %v1060 = vunpack.c.h.b16 %v1042
        %v1061 = vpack.c.b16 %v1051, %v1049
        %v1062 = vpack.c.b16 %v1052, %v1050
        %v1063 = vpack.c.b16 %v1055, %v1053
        %v1064 = vpack.c.b16 %v1056, %v1054
        %v1065 = vpack.c.b16 %v1059, %v1057
        %v1066 = vpack.c.b16 %v1060, %v1058
        %v1074 = vsel %vm843, %v1035, 0
        %1076 = vmatpush.bf16.msra.mxu0 0
        %1077 = vmatpush.bf16.msra.mxu0 0
        %1078 = vmatpush.bf16.msra.mxu0 0
        %1079 = vmatpush.bf16.msra.mxu0 0
        %1080 = vmatpush.bf16.msra.mxu0 0
        %1081 = vmatpush.bf16.msra.mxu0 %v1065
        %1082 = vmatpush.bf16.msra.mxu0 %v1063
        %1083 = vmatpush.bf16.msra.mxu0 %v1061
        %1084 = vmatmul.bf16.gmra.mxu0 %v1074
        %v1085 = vpop.f32.mrf.mxu0
        %v1086 = vadd.f32 0.0, %v1085
        %v1087 = vpop.f32.mrf.mxu0
        %1088 = vdwg.mxu0
        %1089 = vmatpush.bf16.msra.mxu0 0
        %1090 = vmatpush.bf16.msra.mxu0 0
        %1091 = vmatpush.bf16.msra.mxu0 0
        %1092 = vmatpush.bf16.msra.mxu0 0
        %1093 = vmatpush.bf16.msra.mxu0 0
        %1094 = vmatpush.bf16.msra.mxu0 %v1066
        %1095 = vmatpush.bf16.msra.mxu0 %v1064
        %1096 = vmatpush.bf16.msra.mxu0 %v1062
        %1097 = vmatmul.bf16.gmra.mxu0 %v1074
        %v1098 = vpop.f32.mrf.mxu0
        %v1099 = vadd.f32 0.0, %v1098
        %v1100 = vpop.f32.mrf.mxu0
        %1101 = vdwg.mxu0
        %v1102 = vadd.f32 %v1033, %v1086
        %v1103 = vadd.f32 %v1034, %v1099
        %1104 = vst [vmem:[#allocation2] sm:$0xff] %v1102
        %1105 = vst.msk [vmem:[#allocation2 + $0x8] sm:$0xff] %vm685, %v1103
        %s1106 = scalar_lea.vmem [#allocation8], 8
        %v1107 = vld [vmem:[%s1106] sm:$0xf]
        %v1108 = vunpack.c.l.bf16 %v1107
        %v1109 = vunpack.c.h.b16 %v834
        %v1110 = vpack.c.b16 %v1109, %v1109
        %1111 = vrot.lane.b32.xlu0 %v972, 32
        %v1112 = vpop.permute.xlu0 %1111
        %1113 = vrot.lane.b32.xlu0 %v1110, 32
        %v1114 = vpop.permute.xlu0 %1113
        %vm1115 = vcmask 261120
        %v1116 = vsel %vm1115, %v1112, %v1114
        %v1117 = vunpack.c.h.b16 %v819
        %v1118 = vpack.c.b16 %v1117, %v1117
        %1119 = vrot.lane.b32.xlu0 %v976, 32
        %v1120 = vpop.permute.xlu0 %1119
        %1121 = vrot.lane.b32.xlu0 %v1118, 32
        %v1122 = vpop.permute.xlu0 %1121
        %v1123 = vsel %vm1115, %v1120, %v1122
        %v1125 = vsel %vm843, %v1116, 0
        %v1128 = vsel %vm843, %v1123, 0
        %1130 = vmatpush.bf16.xpose.msra.mxu0 0
        %1131 = vmatpush.bf16.xpose.msra.mxu0 0
        %1132 = vmatpush.bf16.xpose.msra.mxu0 0
        %1133 = vmatpush.bf16.xpose.msra.mxu0 0
        %1134 = vmatpush.bf16.xpose.msra.mxu0 0
        %1135 = vmatpush.bf16.xpose.msra.mxu0 0
        %1136 = vmatpush.bf16.xpose.msra.mxu0 0
        %1137 = vmatpush.bf16.xpose.msra.mxu0 %v1128
        %1138 = vmatmul.bf16.gmra.mxu0 %v1125
        %v1139 = vpop.f32.mrf.mxu0
        %v1140 = vadd.f32 %v1108, %v1139
        %v1141 = vpop.f32.mrf.mxu0
        %1142 = vdwg.mxu0
        %v1143 = vsel %vm863, %v1140, -inf
        %1144 = vmax.xlane.f32.xlu0 %v1143
        %v1145 = vpop.xlane.xlu0 %1144
        %v1146 = vsub.f32 %v1140, %v1145
        %v1147 = vmul.f32 %v1146, 1.442695
        %v1148 = vpow.pop %v1147
        %v1149 = vsel %vm863, %v1148, 0.0
        %1150 = vadd.xlane.f32.xlu0 %v1149
        %v1151 = vpop.xlane.xlu0 %1150
        %v1152 = vrcp.pop %v1151
        %v1153 = vmul.f32 %v1148, %v1152
        %v1154 = vpack.c.bf16 %v1153, %v1153
        %v1155 = vunpack.c.h.b16 %v838
        %v1156 = vpack.c.b16 %v1155, %v1155
        %1157 = vrot.lane.b32.xlu0 %v1011, 32
        %v1158 = vpop.permute.xlu0 %1157
        %1159 = vrot.lane.b32.xlu0 %v1156, 32
        %v1160 = vpop.permute.xlu0 %1159
        %v1161 = vsel %vm1115, %v1158, %v1160
        %v1163 = vsel %vm863, %v1154, 0
        %v1166 = vsel %vm879, %v1161, 0
        %1168 = vmatpush.bf16.msra.mxu0 0
        %1169 = vmatpush.bf16.msra.mxu0 0
        %1170 = vmatpush.bf16.msra.mxu0 0
        %1171 = vmatpush.bf16.msra.mxu0 0
        %1172 = vmatpush.bf16.msra.mxu0 0
        %1173 = vmatpush.bf16.msra.mxu0 0
        %1174 = vmatpush.bf16.msra.mxu0 0
        %1175 = vmatpush.bf16.msra.mxu0 %v1166
        %1176 = vmatmul.bf16.gmra.mxu0 %v1163
        %v1177 = vpop.f32.mrf.mxu0
        %v1178 = vadd.f32 0.0, %v1177
        %v1179 = vpop.f32.mrf.mxu0
        %1180 = vdwg.mxu0
        %v1181 = vld [vmem:[#allocation2] sm:$0xff]
        %v1182 = vld [vmem:[#allocation2 + $0x8] sm:$0xff]
        %v1183 = vpack.c.bf16 %v1178, %v1178
        %s1184 = scalar_lea.vmem [#allocation9], 96
        %v1185 = vld [vmem:[%s1184] sm:$0xff]
        %v1186 = vld [vmem:[%s1184 + $0x8] sm:$0xff]
        %v1187 = vld [vmem:[%s1184 + $0x10] sm:$0xff]
        %v1188 = vld [vmem:[%s1184 + $0x18] sm:$0xff]
        %v1189 = vld [vmem:[%s1184 + $0x20] sm:$0xff]
        %v1190 = vld [vmem:[%s1184 + $0x28] sm:$0xff]
        %v1197 = vunpack.c.l.b16 %v1185
        %v1198 = vunpack.c.h.b16 %v1185
        %v1199 = vunpack.c.l.b16 %v1186
        %v1200 = vunpack.c.h.b16 %v1186
        %v1201 = vunpack.c.l.b16 %v1187
        %v1202 = vunpack.c.h.b16 %v1187
        %v1203 = vunpack.c.l.b16 %v1188
        %v1204 = vunpack.c.h.b16 %v1188
        %v1205 = vunpack.c.l.b16 %v1189
        %v1206 = vunpack.c.h.b16 %v1189
        %v1207 = vunpack.c.l.b16 %v1190
        %v1208 = vunpack.c.h.b16 %v1190
        %v1209 = vpack.c.b16 %v1199, %v1197
        %v1210 = vpack.c.b16 %v1200, %v1198
        %v1211 = vpack.c.b16 %v1203, %v1201
        %v1212 = vpack.c.b16 %v1204, %v1202
        %v1213 = vpack.c.b16 %v1207, %v1205
        %v1214 = vpack.c.b16 %v1208, %v1206
        %v1222 = vsel %vm843, %v1183, 0
        %1224 = vmatpush.bf16.msra.mxu0 0
        %1225 = vmatpush.bf16.msra.mxu0 0
        %1226 = vmatpush.bf16.msra.mxu0 0
        %1227 = vmatpush.bf16.msra.mxu0 0
        %1228 = vmatpush.bf16.msra.mxu0 0
        %1229 = vmatpush.bf16.msra.mxu0 %v1213
        %1230 = vmatpush.bf16.msra.mxu0 %v1211
        %1231 = vmatpush.bf16.msra.mxu0 %v1209
        %1232 = vmatmul.bf16.gmra.mxu0 %v1222
        %v1233 = vpop.f32.mrf.mxu0
        %v1234 = vadd.f32 0.0, %v1233
        %v1235 = vpop.f32.mrf.mxu0
        %1236 = vdwg.mxu0
        %1237 = vmatpush.bf16.msra.mxu0 0
        %1238 = vmatpush.bf16.msra.mxu0 0
        %1239 = vmatpush.bf16.msra.mxu0 0
        %1240 = vmatpush.bf16.msra.mxu0 0
        %1241 = vmatpush.bf16.msra.mxu0 0
        %1242 = vmatpush.bf16.msra.mxu0 %v1214
        %1243 = vmatpush.bf16.msra.mxu0 %v1212
        %1244 = vmatpush.bf16.msra.mxu0 %v1210
        %1245 = vmatmul.bf16.gmra.mxu0 %v1222
        %v1246 = vpop.f32.mrf.mxu0
        %v1247 = vadd.f32 0.0, %v1246
        %v1248 = vpop.f32.mrf.mxu0
        %1249 = vdwg.mxu0
        %v1250 = vadd.f32 %v1181, %v1234
        %v1251 = vadd.f32 %v1182, %v1247
        %1252 = vst [vmem:[#allocation2] sm:$0xff] %v1250
        %1253 = vst.msk [vmem:[#allocation2 + $0x8] sm:$0xff] %vm685, %v1251
        %s1254 = scalar_lea.vmem [#allocation8], 12
        %v1255 = vld [vmem:[%s1254] sm:$0xf]
        %v1256 = vunpack.c.l.bf16 %v1255
        %1257 = vrot.lane.b32.xlu0 %v1110, 112
        %v1258 = vpop.permute.xlu0 %1257
        %1259 = vrot.lane.b32.xlu0 %v1118, 112
        %v1260 = vpop.permute.xlu0 %1259
        %v1262 = vsel %vm843, %v1258, 0
        %v1265 = vsel %vm843, %v1260, 0
        %1267 = vmatpush.bf16.xpose.msra.mxu0 0
        %1268 = vmatpush.bf16.xpose.msra.mxu0 0
        %1269 = vmatpush.bf16.xpose.msra.mxu0 0
        %1270 = vmatpush.bf16.xpose.msra.mxu0 0
        %1271 = vmatpush.bf16.xpose.msra.mxu0 0
        %1272 = vmatpush.bf16.xpose.msra.mxu0 0
        %1273 = vmatpush.bf16.xpose.msra.mxu0 0
        %1274 = vmatpush.bf16.xpose.msra.mxu0 %v1265
        %1275 = vmatmul.bf16.gmra.mxu0 %v1262
        %v1276 = vpop.f32.mrf.mxu0
        %v1277 = vadd.f32 %v1256, %v1276
        %v1278 = vpop.f32.mrf.mxu0
        %1279 = vdwg.mxu0
        %v1280 = vsel %vm863, %v1277, -inf
        %1281 = vmax.xlane.f32.xlu0 %v1280
        %v1282 = vpop.xlane.xlu0 %1281
        %v1283 = vsub.f32 %v1277, %v1282
        %v1284 = vmul.f32 %v1283, 1.442695
        %v1285 = vpow.pop %v1284
        %v1286 = vsel %vm863, %v1285, 0.0
        %1287 = vadd.xlane.f32.xlu0 %v1286
        %v1288 = vpop.xlane.xlu0 %1287
        %v1289 = vrcp.pop %v1288
        %v1290 = vmul.f32 %v1285, %v1289
        %v1291 = vpack.c.bf16 %v1290, %v1290
        %1292 = vrot.lane.b32.xlu0 %v1156, 112
        %v1293 = vpop.permute.xlu0 %1292
        %v1295 = vsel %vm863, %v1291, 0
        %v1298 = vsel %vm879, %v1293, 0
        %1300 = vmatpush.bf16.msra.mxu0 0
        %1301 = vmatpush.bf16.msra.mxu0 0
        %1302 = vmatpush.bf16.msra.mxu0 0
        %1303 = vmatpush.bf16.msra.mxu0 0
        %1304 = vmatpush.bf16.msra.mxu0 0
        %1305 = vmatpush.bf16.msra.mxu0 0
        %1306 = vmatpush.bf16.msra.mxu0 0
        %1307 = vmatpush.bf16.msra.mxu0 %v1298
        %1308 = vmatmul.bf16.gmra.mxu0 %v1295
        %v1309 = vpop.f32.mrf.mxu0
        %v1310 = vadd.f32 0.0, %v1309
        %v1311 = vpop.f32.mrf.mxu0
        %1312 = vdwg.mxu0
        %v1313 = vld [vmem:[#allocation2] sm:$0xff]
        %v1314 = vld [vmem:[#allocation2 + $0x8] sm:$0xff]
        %v1315 = vpack.c.bf16 %v1310, %v1310
        %s1316 = scalar_lea.vmem [#allocation9], 144
        %v1317 = vld [vmem:[%s1316] sm:$0xff]
        %v1318 = vld [vmem:[%s1316 + $0x8] sm:$0xff]
        %v1319 = vld [vmem:[%s1316 + $0x10] sm:$0xff]
        %v1320 = vld [vmem:[%s1316 + $0x18] sm:$0xff]
        %v1321 = vld [vmem:[%s1316 + $0x20] sm:$0xff]
        %v1322 = vld [vmem:[%s1316 + $0x28] sm:$0xff]
        %v1329 = vunpack.c.l.b16 %v1317
        %v1330 = vunpack.c.h.b16 %v1317
        %v1331 = vunpack.c.l.b16 %v1318
        %v1332 = vunpack.c.h.b16 %v1318
        %v1333 = vunpack.c.l.b16 %v1319
        %v1334 = vunpack.c.h.b16 %v1319
        %v1335 = vunpack.c.l.b16 %v1320
        %v1336 = vunpack.c.h.b16 %v1320
        %v1337 = vunpack.c.l.b16 %v1321
        %v1338 = vunpack.c.h.b16 %v1321
        %v1339 = vunpack.c.l.b16 %v1322
        %v1340 = vunpack.c.h.b16 %v1322
        %v1341 = vpack.c.b16 %v1331, %v1329
        %v1342 = vpack.c.b16 %v1332, %v1330
        %v1343 = vpack.c.b16 %v1335, %v1333
        %v1344 = vpack.c.b16 %v1336, %v1334
        %v1345 = vpack.c.b16 %v1339, %v1337
        %v1346 = vpack.c.b16 %v1340, %v1338
        %v1354 = vsel %vm843, %v1315, 0
        %1356 = vmatpush.bf16.msra.mxu0 0
        %1357 = vmatpush.bf16.msra.mxu0 0
        %1358 = vmatpush.bf16.msra.mxu0 0
        %1359 = vmatpush.bf16.msra.mxu0 0
        %1360 = vmatpush.bf16.msra.mxu0 0
        %1361 = vmatpush.bf16.msra.mxu0 %v1345
        %1362 = vmatpush.bf16.msra.mxu0 %v1343
        %1363 = vmatpush.bf16.msra.mxu0 %v1341
        %1364 = vmatmul.bf16.gmra.mxu0 %v1354
        %v1365 = vpop.f32.mrf.mxu0
        %v1366 = vadd.f32 0.0, %v1365
        %v1367 = vpop.f32.mrf.mxu0
        %1368 = vdwg.mxu0
        %1369 = vmatpush.bf16.msra.mxu0 0
        %1370 = vmatpush.bf16.msra.mxu0 0
        %1371 = vmatpush.bf16.msra.mxu0 0
        %1372 = vmatpush.bf16.msra.mxu0 0
        %1373 = vmatpush.bf16.msra.mxu0 0
        %1374 = vmatpush.bf16.msra.mxu0 %v1346
        %1375 = vmatpush.bf16.msra.mxu0 %v1344
        %1376 = vmatpush.bf16.msra.mxu0 %v1342
        %1377 = vmatmul.bf16.gmra.mxu0 %v1354
        %v1378 = vpop.f32.mrf.mxu0
        %v1379 = vadd.f32 0.0, %v1378
        %v1380 = vpop.f32.mrf.mxu0
        %1381 = vdwg.mxu0
        %v1382 = vadd.f32 %v1313, %v1366
        %v1383 = vadd.f32 %v1314, %v1379
        %1384 = vst [vmem:[#allocation2] sm:$0xff] %v1382
        %1385 = vst.msk [vmem:[#allocation2 + $0x8] sm:$0xff] %vm685, %v1383
        %v1386 = vld [vmem:[#allocation2] sm:$0xff]
        %v1387 = vld [vmem:[#allocation2 + $0x8] sm:$0xff]
        %v1389 = vperm.slane %v822, 0
        %v1390 = vperm.slane %v822, 1
        %v1393 = vadd.f32 %v1386, %v1389
        %v1394 = vadd.f32 %v1387, %v1390
        %1395 = vst [vmem:[%s292] sm:$0xff] %v1393
        %1396 = vst.msk [vmem:[%s292 + $0x8] sm:$0xff] %vm685, %v1394
        %s1397 = sand.u32 %s142, 1
        %s1398 = scalar_lea.sflag [#allocation5], %s1397
        %s1399 = sand.u32 %s142, 1
        %s1400 = smul.addr %s1399, 16
        %s1401 = scalar_lea.vmem [#allocation11], %s1400
        // Predicated region
        $region57: #{tpu_custom_call.1} parent=39 // pred_check
          %p1402 = pneg %p152
        $region58: #{tpu_custom_call.1} parent=39 // pred_check_branch
          %1404 = sbr.rel (%p1402) target = $region60
        $region59: #{tpu_custom_call.1} parent=39 // pred_region
          %1406 = vsyncadd %s1398, 0
          %s1407 = smul.addr %s24, 2
          %s1408 = smul.addr %s1407, 8
          %s1409 = scalar_lea.hbm %s5, %s1408
          %s1411 = sshll.u32 %s1401, 4
          %s1412 = int_to_ptr.vmem [resolvable:$true] %s1411
          %s1413 = sshll.u32 %s1409, 4
          %s1414 = int_to_ptr.hbm [resolvable:$true] %s1413
          %1416 = dma.vmem_to_hbm [thread:$0]  %s1412, 256, %s1414, %s1398
        $region60: #{tpu_custom_call.1} parent=39 // pred_fallthru
          _
      $region40: #{tpu_custom_call.1} parent=5 // pred_fallthru
        _
      %p1417 = scmp.le.s32.totalorder 2, %s19
      // Predicated region
      $region61: #{tpu_custom_call.1} parent=5 // pred_check
        %p1418 = pneg %p1417
      $region62: #{tpu_custom_call.1} parent=5 // pred_check_branch
        %1420 = sbr.rel (%p1418) target = $region64
      $region63: #{tpu_custom_call.1} parent=5 // pred_region
        %s1421 = ssub.s32 %s19, 2
        // Predicated region
        $region65: #{tpu_custom_call.1} parent=63 // pred_check
          %p1422 = pneg %p158
        $region66: #{tpu_custom_call.1} parent=63 // pred_check_branch
          %1424 = sbr.rel (%p1422) target = $region68
        $region67: #{tpu_custom_call.1} parent=63 // pred_region
          %s1425 = sand.u32 %s143, 1
          %s1426 = scalar_lea.sflag [#allocation5], %s1425
          %s1427 = sand.u32 %s143, 1
          %s1428 = smul.addr %s1427, 16
          %s1429 = scalar_lea.vmem [#allocation11], %s1428
          %1431 = dma.done %s1426, 256
        $region68: #{tpu_custom_call.1} parent=63 // pred_fallthru
          _
      $region64: #{tpu_custom_call.1} parent=5 // pred_fallthru
        _
    $region6: #{tpu_custom_call.1} parent=1 // loop_footer
      %s23 = sadd.s32 1, %s19
    $region7: #{tpu_custom_call.1} parent=1 // loop_footer_branch
      %18 = sbr.rel target = $region3
    $region8: #{tpu_custom_call.1} parent=1 // loop_exit
      _
    %1432 = vsyncpa [#allocation4], 1
    %s1433 = scalar_lea.sflag [#allocation4], 1
    %1434 = vsyncpa %s1433, 1
    %1435 = vsyncpa [#allocation7], 1
    %1436 = vsyncpa [#allocation10], 1
    %1437 = vsyncpa [#allocation5], 1
    %s1438 = scalar_lea.sflag [#allocation5], 1
    %1439 = vsyncpa %s1438, 1

</llo_original>
